<compile_context>
chip_gen: v6e
topology: v6e:2x2x1
jax: 0.10.0
libtpu: 0.0.40
codegen_flags: <defaults>
</compile_context>

<pallas_src>
import functools
import math

import jax
import jax.numpy as jnp
from jax import lax
from jax.experimental import pallas as pl
from jax.experimental.pallas import tpu as pltpu

_LN_EPS = 1e-5


def _round_up(n, m):
    return ((n + m - 1) // m) * m


def _target_out_lanes():
    """256-lane outputs on the 256-wide-MXU chips (v6e/v7x), 128 elsewhere."""
    try:
        kind = jax.devices()[0].device_kind.lower()
    except Exception:
        return 128
    if "v6" in kind or "v7" in kind or "7x" in kind:
        return 256
    return 128


def _packing_candidates(d_model, d_in, target_lanes, max_in_lanes=2048, max_r=128):
    """Row-packing factors r (widest first) with lane-dense (r*d_model) % 128 == 0."""
    base = math.lcm(d_model, 128) // d_model
    if base > max_r or base * d_in > max_in_lanes:
        return [1]
    wide = base
    while (wide * d_model < target_lanes and 2 * wide <= max_r
           and 2 * wide * d_in <= max_in_lanes):
        wide *= 2
    cands = []
    for r in (wide, base, 1):
        if r not in cands:
            cands.append(r)
    return cands


def _fused_kernel(*refs, apply_ln, use_seg_stats, inv_d, eps, mxu_dtype):
    """Fused (optional LayerNorm) + Linear over a (tm, D) block of rows."""
    if use_seg_stats:
        x_ref, s_ref, st_ref, w_ref, b_ref, o_ref = refs
    else:
        x_ref, w_ref, b_ref, o_ref = refs

    x_raw = x_ref[...]
    x = x_raw.astype(jnp.float32)                 # LN stats / centering in f32

    if apply_ln:
        if use_seg_stats:
            # Packed rows: r logical segments share one lane-row.  Per-segment
            # sums via the thin 0/1 matrix S (D, 128); E[x^2] - mean^2 keeps
            # the two stats dots independent.  MXU operands are bf16 with f32
            # accumulation; the exact 1/d_in scale is applied on the VPU.
            xb = x_raw if x_raw.dtype == mxu_dtype else x.astype(mxu_dtype)
            s = s_ref[...]
            sums = jnp.dot(xb, s, preferred_element_type=jnp.float32)
            sumsq = jnp.dot((x * x).astype(mxu_dtype), s,
                            preferred_element_type=jnp.float32)
            mean_s = sums * inv_d
            var_s = jnp.maximum(sumsq * inv_d - mean_s * mean_s, 0.0)
            rstd_s = lax.rsqrt(var_s + eps)
            st = st_ref[...]                      # 0/1 broadcast matrix (128, D)
            mean = jnp.dot(mean_s.astype(mxu_dtype), st,
                           preferred_element_type=jnp.float32)
            rstd = jnp.dot(rstd_s.astype(mxu_dtype), st,
                           preferred_element_type=jnp.float32)
            x = (x - mean) * rstd
        else:
            # Unpacked fallback: row-wise LN via lane reductions (XLU/EUP).
            mean = jnp.mean(x, axis=-1, keepdims=True)
            cent = x - mean
            var = jnp.mean(cent * cent, axis=-1, keepdims=True)
            x = cent * lax.rsqrt(var + eps)

    # LN affine pre-folded into w/b; bf16 MXU operands, f32 accumulate.
    y = jnp.dot(x.astype(mxu_dtype), w_ref[...],
                preferred_element_type=jnp.float32)
    y = y + b_ref[...]
    o_ref[...] = y.astype(o_ref.dtype)


def _call_fused(rows, w, b, *, s=None, st=None, seg_width, apply_ln,
                eps=_LN_EPS, tm_max=1024, mxu_dtype=jnp.bfloat16):
    """rows: (N, D) -> (N, d_out) via (optional LayerNorm) + Linear."""
    N, D = rows.shape
    d_out = w.shape[1]
    use_seg_stats = apply_ln and (s is not None)

    w = w.astype(mxu_dtype)
    b2 = b.reshape(1, d_out).astype(jnp.float32)
    if use_seg_stats:
        s = s.astype(mxu_dtype)
        st = st.astype(mxu_dtype)

    # Row tile: big enough to amortise the ~0.35us per-grid-step overhead, small
    # enough to (a) fit VMEM with headroom and (b) leave >= 4 grid steps when N
    # allows, i.e. >= 2 steps per TensorCore on v7x so the pipeline overlaps.
    row_bytes = rows.dtype.itemsize
    per_row_bytes = 2 * (D + d_out) * row_bytes + 6 * max(D, 128) * 4
    tm_budget = max(8, ((12 << 20) // per_row_bytes) // 8 * 8)
    tm = min(tm_max, tm_budget, max(8, _round_up(-(-N // 4), 8)))
    if tm >= N:
        tm = N                                    # single full-extent block
    grid = (pl.cdiv(N, tm),)

    const_bytes = w.size * w.dtype.itemsize + b2.size * 4
    if use_seg_stats:
        const_bytes += (s.size + st.size) * s.dtype.itemsize
    est = tm * per_row_bytes + const_bytes
    vmem_limit = int(min(48 << 20, max(32 << 20, 2 * est)))

    kernel = functools.partial(
        _fused_kernel, apply_ln=apply_ln, use_seg_stats=use_seg_stats,
        inv_d=1.0 / float(seg_width), eps=eps, mxu_dtype=mxu_dtype)

    def build(single_buffer_consts):
        # Constant-index_map operands are fetched once; single-buffer them.
        ckw = ({"pipeline_mode": pl.Buffered(1)} if single_buffer_consts else {})
        in_specs = [pl.BlockSpec((tm, D), lambda i: (i, 0))]
        inputs = [rows]
        if use_seg_stats:
            in_specs += [pl.BlockSpec(s.shape, lambda i: (0, 0), **ckw),
                         pl.BlockSpec(st.shape, lambda i: (0, 0), **ckw)]
            inputs += [s, st]
        in_specs += [pl.BlockSpec((D, d_out), lambda i: (0, 0), **ckw),
                     pl.BlockSpec((1, d_out), lambda i: (0, 0), **ckw)]
        inputs += [w, b2]
        return pl.pallas_call(
            kernel,
            out_shape=jax.ShapeDtypeStruct((N, d_out), rows.dtype),
            grid=grid,
            in_specs=in_specs,
            out_specs=pl.BlockSpec((tm, d_out), lambda i: (i, 0)),
            compiler_params=pltpu.CompilerParams(
                dimension_semantics=("parallel",),
                vmem_limit_bytes=vmem_limit),
        )(*inputs)

    try:
        return build(True)
    except Exception:
        # Fallback for jax versions where pipeline_mode=pl.Buffered(1) is not
        # accepted on pallas_call operands: constants stay double-buffered.
        return build(False)


class SegMergingPallas:
    """JAX/Pallas port of winformer SegMerging."""

    def __init__(self, d_model, scale, win_size, seg_num, key, tm_max=1024):
        self.d_model = d_model
        self.scale = scale
        self.win_size = win_size
        self.seg_num = seg_num
        self.tm_max = tm_max

        self.merge = seg_num > win_size
        lin_in = scale * d_model if self.merge else d_model
        self.lin_in = lin_in
        k_w, k_b = jax.random.split(key)
        bound = 1.0 / float(lin_in) ** 0.5
        # nn.Linear weight is (out, in); keep the transposed (in, out) copy.
        self.w_t = jax.random.uniform(k_w, (lin_in, d_model), jnp.float32,
                                      minval=-bound, maxval=bound)
        self.lin_bias = jax.random.uniform(k_b, (d_model,), jnp.float32,
                                           minval=-bound, maxval=bound)
        # LayerNorm(scale * d_model) params (defaults: ones / zeros).
        self.ln_gamma = jnp.ones((scale * d_model,), jnp.float32)
        self.ln_beta = jnp.zeros((scale * d_model,), jnp.float32)

        # Fold the LayerNorm affine into the projection (merge branch only).
        if self.merge:
            self._w_fold = self.ln_gamma[:, None] * self.w_t      # (d_in, d_model)
            self._b_fold = self.ln_beta @ self.w_t + self.lin_bias
        else:
            self._w_fold = self.w_t
            self._b_fold = self.lin_bias

        # Lane-packing candidates (widest first); precompute operands per r.
        self._rs = _packing_candidates(d_model, lin_in, _target_out_lanes())
        self._ops = {r: self._make_operands(r) for r in self._rs}

    def _make_operands(self, r):
        if r == 1:
            return dict(w=self._w_fold.astype(jnp.bfloat16),
                        b=self._b_fold, s=None, st=None)
        d_in = self.lin_in
        eye = jnp.eye(r, dtype=jnp.float32)
        w = jnp.kron(eye, self._w_fold).astype(jnp.bfloat16)      # block-diagonal
        b = jnp.tile(self._b_fold, r)
        s = st = None
        if self.merge:
            # Thin 0/1 segment-sum matrix S (D, 128) and its broadcast S^T.
            D = r * d_in
            seg_id = jnp.arange(D) // d_in
            s = (seg_id[:, None] == jnp.arange(128)[None, :]).astype(jnp.bfloat16)
            st = jnp.transpose(s)
        return dict(w=w, b=b, s=s, st=st)

    def _run(self, rows, *, apply_ln):
        N, d_in = rows.shape
        r = next((rr for rr in self._rs if N % rr == 0), 1)
        ops = self._ops[r]
        if r > 1:
            rows_p = rows.reshape(N // r, r * d_in)        # free row-major repack
            out = _call_fused(rows_p, ops["w"], ops["b"], s=ops["s"], st=ops["st"],
                              seg_width=d_in, apply_ln=apply_ln,
                              tm_max=self.tm_max)
            return out.reshape(N, self.d_model)
        # Fallback: row-wise LN / possibly lane-sparse output when N is not a
        # multiple of r or d_model cannot be packed.
        return _call_fused(rows, ops["w"], ops["b"], seg_width=d_in,
                           apply_ln=apply_ln, tm_max=self.tm_max)

    def __call__(self, x):
        batch, ts_d, seg_num, d_model = x.shape
        if seg_num > self.win_size:
            pad_num = seg_num % self.scale
            if pad_num != 0:
                # TODO(synk): rare path; fold the tail replication into the
                # kernel index_map instead of materialising a padded copy of x.
                pad_num = self.scale - pad_num
                x = jnp.concatenate([x, x[:, :, -pad_num:, :]], axis=-2)
            merged = x.shape[2] // self.scale
            d_in = self.scale * d_model
            # concat of x[:, :, i::scale, :] along last dim == this reshape.
            rows = x.reshape(batch * ts_d * merged, d_in)
            out = self._run(rows, apply_ln=True)
            return out.reshape(batch, ts_d, merged, self.d_model)
        else:
            rows = x.reshape(batch * ts_d * seg_num, d_model)
            out = self._run(rows, apply_ln=False)
            return out.reshape(batch, ts_d, seg_num, self.d_model)


def _reference(module, x):
    """Pure-JAX f32 reference mirroring the PyTorch forward."""
    batch, ts_d, seg_num, d_model = x.shape
    x = x.astype(jnp.float32)
    if seg_num > module.win_size:
        pad_num = seg_num % module.scale
        if pad_num != 0:
            pad_num = module.scale - pad_num
            x = jnp.concatenate([x, x[:, :, -pad_num:, :]], axis=-2)
        segs = [x[:, :, i::module.scale, :] for i in range(module.scale)]
        x = jnp.concatenate(segs, axis=-1)
        mean = jnp.mean(x, axis=-1, keepdims=True)
        var = jnp.mean((x - mean) ** 2, axis=-1, keepdims=True)
        x = (x - mean) / jnp.sqrt(var + _LN_EPS)
        x = x * module.ln_gamma + module.ln_beta
    return jnp.dot(x, module.w_t) + module.lin_bias


if __name__ == "__main__":
    key = jax.random.PRNGKey(0)
    ks = jax.random.split(key, 10)

    # --- 1) merge + LayerNorm, lane-packed seg-stats path (d_model=32) ------
    batch, ts_d, seg_num, d_model = 2, 4, 8, 32
    scale, win_size = 2, 4
    mod1 = SegMergingPallas(d_model, scale, win_size, seg_num, ks[0])
    x1 = jax.random.normal(ks[4], (batch, ts_d, seg_num, d_model), jnp.float32)
    out1 = jax.block_until_ready(mod1(x1))
    ref1 = _reference(mod1, x1)
    assert out1.shape == (batch, ts_d, seg_num // scale, d_model)
    assert jnp.allclose(out1, ref1, atol=3e-2, rtol=3e-2), "merge branch mismatch"

    # --- 2) plain-linear branch (seg_num <= win_size), lane-packed ----------
    mod2 = SegMergingPallas(d_model, scale, 4, 4, ks[1])
    x2 = jax.random.normal(ks[5], (batch, ts_d, 4, d_model), jnp.float32)
    out2 = jax.block_until_ready(mod2(x2))
    ref2 = _reference(mod2, x2)
    assert out2.shape == (batch, ts_d, 4, d_model)
    assert jnp.allclose(out2, ref2, atol=2e-2, rtol=2e-2), "linear branch mismatch"

    # --- 3) merge + LN, d_model=48 (lcm lane packing -> 384-lane rows) ------
    mod3 = SegMergingPallas(48, scale, win_size, seg_num, ks[2])
    x3 = jax.random.normal(ks[6], (batch, ts_d, seg_num, 48), jnp.float32)
    out3 = jax.block_until_ready(mod3(x3))
    ref3 = _reference(mod3, x3)
    assert out3.shape == (batch, ts_d, seg_num // scale, 48)
    assert jnp.allclose(out3, ref3, atol=3e-2, rtol=3e-2), "lcm packing mismatch"

    # --- 4) padding path (seg_num % scale != 0) ------------------------------
    mod4 = SegMergingPallas(d_model, scale, win_size, 7, ks[3])
    x4 = jax.random.normal(ks[7], (batch, ts_d, 7, d_model), jnp.float32)
    out4 = jax.block_until_ready(mod4(x4))
    ref4 = _reference(mod4, x4)
    assert out4.shape == (batch, ts_d, 4, d_model)
    assert jnp.allclose(out4, ref4, atol=3e-2, rtol=3e-2), "pad path mismatch"

    # --- 5) unpacked row-wise LN fallback (N not divisible by r) ------------
    mod5 = SegMergingPallas(d_model, scale, 2, 6, ks[0])
    x5 = jax.random.normal(ks[8], (1, 1, 6, d_model), jnp.float32)
    out5 = jax.block_until_ready(mod5(x5))
    ref5 = _reference(mod5, x5)
    assert out5.shape == (1, 1, 3, d_model)
    assert jnp.allclose(out5, ref5, atol=2e-2, rtol=2e-2), "row-wise LN mismatch"

    # --- 6) bf16 activations end-to-end (halves HBM traffic) ----------------
    out6 = jax.block_until_ready(mod1(x1.astype(jnp.bfloat16)))
    assert out6.dtype == jnp.bfloat16
    assert jnp.allclose(out6.astype(jnp.float32), ref1, atol=6e-2, rtol=6e-2), \
        "bf16 I/O mismatch"

    print("KERNEL_OK")
</pallas_src>

<mosaic_0001>
module attributes {stable_mosaic.version = 11 : i64} {
  func.func @_fused_kernel(%arg0: i32, %arg1: memref<8x256xf32, #tpu.memory_space<vmem>>, %arg2: memref<256x128xbf16, #tpu.memory_space<vmem>>, %arg3: memref<128x256xbf16, #tpu.memory_space<vmem>>, %arg4: memref<256x128xbf16, #tpu.memory_space<vmem>>, %arg5: memref<1x128xf32, #tpu.memory_space<vmem>>, %arg6: memref<8x128xf32, #tpu.memory_space<vmem>>) attributes {dimension_semantics = [#tpu.dimension_semantics<parallel>], iteration_bounds = array<i64: 1>, scalar_prefetch = 0 : i64, scratch_operands = 0 : i64, tpu.core_type = #tpu.core_type<tc>, window_params = [{transform_indices = @transform_0, window_bounds = array<i64: 8, 256>}, {pipeline_mode = #tpu.pipeline_mode<synchronous>, transform_indices = @transform_1, window_bounds = array<i64: 256, 128>}, {pipeline_mode = #tpu.pipeline_mode<synchronous>, transform_indices = @transform_2, window_bounds = array<i64: 128, 256>}, {pipeline_mode = #tpu.pipeline_mode<synchronous>, transform_indices = @transform_3, window_bounds = array<i64: 256, 128>}, {pipeline_mode = #tpu.pipeline_mode<synchronous>, transform_indices = @transform_4, window_bounds = array<i64: 1, 128>}, {transform_indices = @transform_5, window_bounds = array<i64: 8, 128>}]} {
    %c0 = arith.constant 0 : index
    %c0_0 = arith.constant 0 : index
    %0 = vector.load %arg1[%c0, %c0_0] : memref<8x256xf32, #tpu.memory_space<vmem>>, vector<8x256xf32>
    %1 = arith.truncf %0 : vector<8x256xf32> to vector<8x256xbf16>
    %c0_1 = arith.constant 0 : index
    %c0_2 = arith.constant 0 : index
    %2 = vector.load %arg2[%c0_1, %c0_2] : memref<256x128xbf16, #tpu.memory_space<vmem>>, vector<256x128xbf16>
    %cst = arith.constant dense<0.000000e+00> : vector<8x128xf32>
    %3 = tpu.matmul %1, %2, %cst {dimension_numbers = #tpu.dot_dimension_numbers<[1], [0], [0], [1], [0, 0, 1, 1], [], []>} : vector<8x256xbf16>, vector<256x128xbf16>, vector<8x128xf32> -> vector<8x128xf32>
    %4 = arith.mulf %0, %0 : vector<8x256xf32>
    %5 = arith.truncf %4 : vector<8x256xf32> to vector<8x256xbf16>
    %cst_3 = arith.constant dense<0.000000e+00> : vector<8x128xf32>
    %6 = tpu.matmul %5, %2, %cst_3 {dimension_numbers = #tpu.dot_dimension_numbers<[1], [0], [0], [1], [0, 0, 1, 1], [], []>} : vector<8x256xbf16>, vector<256x128xbf16>, vector<8x128xf32> -> vector<8x128xf32>
    %cst_4 = arith.constant 1.562500e-02 : f32
    %7 = vector.broadcast %cst_4 : f32 to vector<8x128xf32>
    %8 = arith.mulf %3, %7 : vector<8x128xf32>
    %cst_5 = arith.constant 1.562500e-02 : f32
    %9 = vector.broadcast %cst_5 : f32 to vector<8x128xf32>
    %10 = arith.mulf %6, %9 : vector<8x128xf32>
    %11 = arith.mulf %8, %8 : vector<8x128xf32>
    %12 = arith.subf %10, %11 : vector<8x128xf32>
    %cst_6 = arith.constant 0.000000e+00 : f32
    %13 = vector.broadcast %cst_6 : f32 to vector<8x128xf32>
    %14 = arith.maximumf %12, %13 : vector<8x128xf32>
    %cst_7 = arith.constant 9.99999974E-6 : f32
    %15 = vector.broadcast %cst_7 : f32 to vector<8x128xf32>
    %16 = arith.addf %14, %15 : vector<8x128xf32>
    %17 = math.rsqrt %16 : vector<8x128xf32>
    %c0_8 = arith.constant 0 : index
    %c0_9 = arith.constant 0 : index
    %18 = vector.load %arg3[%c0_8, %c0_9] : memref<128x256xbf16, #tpu.memory_space<vmem>>, vector<128x256xbf16>
    %19 = arith.truncf %8 : vector<8x128xf32> to vector<8x128xbf16>
    %cst_10 = arith.constant dense<0.000000e+00> : vector<8x256xf32>
    %20 = tpu.matmul %19, %18, %cst_10 {dimension_numbers = #tpu.dot_dimension_numbers<[1], [0], [0], [1], [0, 0, 1, 1], [], []>} : vector<8x128xbf16>, vector<128x256xbf16>, vector<8x256xf32> -> vector<8x256xf32>
    %21 = arith.truncf %17 : vector<8x128xf32> to vector<8x128xbf16>
    %cst_11 = arith.constant dense<0.000000e+00> : vector<8x256xf32>
    %22 = tpu.matmul %21, %18, %cst_11 {dimension_numbers = #tpu.dot_dimension_numbers<[1], [0], [0], [1], [0, 0, 1, 1], [], []>} : vector<8x128xbf16>, vector<128x256xbf16>, vector<8x256xf32> -> vector<8x256xf32>
    %23 = arith.subf %0, %20 : vector<8x256xf32>
    %24 = arith.mulf %23, %22 : vector<8x256xf32>
    %25 = arith.truncf %24 : vector<8x256xf32> to vector<8x256xbf16>
    %c0_12 = arith.constant 0 : index
    %c0_13 = arith.constant 0 : index
    %26 = vector.load %arg4[%c0_12, %c0_13] : memref<256x128xbf16, #tpu.memory_space<vmem>>, vector<256x128xbf16>
    %cst_14 = arith.constant dense<0.000000e+00> : vector<8x128xf32>
    %27 = tpu.matmul %25, %26, %cst_14 {dimension_numbers = #tpu.dot_dimension_numbers<[1], [0], [0], [1], [0, 0, 1, 1], [], []>} : vector<8x256xbf16>, vector<256x128xbf16>, vector<8x128xf32> -> vector<8x128xf32>
    %c0_15 = arith.constant 0 : index
    %c0_16 = arith.constant 0 : index
    %28 = vector.load %arg5[%c0_15, %c0_16] : memref<1x128xf32, #tpu.memory_space<vmem>>, vector<1x128xf32>
    %29 = vector.broadcast %28 : vector<1x128xf32> to vector<8x128xf32>
    %30 = arith.addf %27, %29 : vector<8x128xf32>
    %c0_17 = arith.constant 0 : index
    %c0_18 = arith.constant 0 : index
    %31 = vector.load %arg6[%c0_17, %c0_18] : memref<8x128xf32, #tpu.memory_space<vmem>>, vector<8x128xf32>
    tpu.vector_store %arg6[%c0_17, %c0_18], %30 {strides = array<i32>} : memref<8x128xf32, #tpu.memory_space<vmem>>, vector<8x128xf32>,
    return
  }
  func.func @transform_0(%arg0: i32) -> (i32, i32) {
    %c0_i32 = arith.constant 0 : i32
    %c0_i32_0 = arith.constant 0 : i32
    return %arg0, %c0_i32 : i32, i32
  }
  func.func @transform_1(%arg0: i32) -> (i32, i32) {
    %c0_i32 = arith.constant 0 : i32
    %c0_i32_0 = arith.constant 0 : i32
    %c0_i32_1 = arith.constant 0 : i32
    return %c0_i32, %c0_i32_0 : i32, i32
  }
  func.func @transform_2(%arg0: i32) -> (i32, i32) {
    %c0_i32 = arith.constant 0 : i32
    %c0_i32_0 = arith.constant 0 : i32
    %c0_i32_1 = arith.constant 0 : i32
    return %c0_i32, %c0_i32_0 : i32, i32
  }
  func.func @transform_3(%arg0: i32) -> (i32, i32) {
    %c0_i32 = arith.constant 0 : i32
    %c0_i32_0 = arith.constant 0 : i32
    %c0_i32_1 = arith.constant 0 : i32
    return %c0_i32, %c0_i32_0 : i32, i32
  }
  func.func @transform_4(%arg0: i32) -> (i32, i32) {
    %c0_i32 = arith.constant 0 : i32
    %c0_i32_0 = arith.constant 0 : i32
    %c0_i32_1 = arith.constant 0 : i32
    return %c0_i32, %c0_i32_0 : i32, i32
  }
  func.func @transform_5(%arg0: i32) -> (i32, i32) {
    %c0_i32 = arith.constant 0 : i32
    %c0_i32_0 = arith.constant 0 : i32
    return %arg0, %c0_i32 : i32, i32
  }
}

module attributes {stable_mosaic.version = 11 : i64} {
  func.func @_fused_kernel(%arg0: i32, %arg1: memref<8x256xf32, #tpu.memory_space<vmem>>, %arg2: memref<256x128xbf16, #tpu.memory_space<vmem>>, %arg3: memref<128x256xbf16, #tpu.memory_space<vmem>>, %arg4: memref<256x128xbf16, #tpu.memory_space<vmem>>, %arg5: memref<1x128xf32, #tpu.memory_space<vmem>>, %arg6: memref<8x128xf32, #tpu.memory_space<vmem>>) attributes {dimension_semantics = [#tpu.dimension_semantics<parallel>], iteration_bounds = array<i64: 1>, scalar_prefetch = 0 : i64, scratch_operands = 0 : i64, tpu.core_type = #tpu.core_type<tc>, window_params = [{transform_indices = @transform_0, window_bounds = array<i64: 8, 256>}, {pipeline_mode = #tpu.pipeline_mode<synchronous>, transform_indices = @transform_1, window_bounds = array<i64: 256, 128>}, {pipeline_mode = #tpu.pipeline_mode<synchronous>, transform_indices = @transform_2, window_bounds = array<i64: 128, 256>}, {pipeline_mode = #tpu.pipeline_mode<synchronous>, transform_indices = @transform_3, window_bounds = array<i64: 256, 128>}, {pipeline_mode = #tpu.pipeline_mode<synchronous>, transform_indices = @transform_4, window_bounds = array<i64: 1, 128>}, {transform_indices = @transform_5, window_bounds = array<i64: 8, 128>}]} {
    %c0 = arith.constant 0 : index
    %c0_0 = arith.constant 0 : index
    %0 = vector.load %arg1[%c0, %c0_0] : memref<8x256xf32, #tpu.memory_space<vmem>>, vector<8x256xf32>
    %1 = arith.truncf %0 : vector<8x256xf32> to vector<8x256xbf16>
    %c0_1 = arith.constant 0 : index
    %c0_2 = arith.constant 0 : index
    %2 = vector.load %arg2[%c0_1, %c0_2] : memref<256x128xbf16, #tpu.memory_space<vmem>>, vector<256x128xbf16>
    %cst = arith.constant dense<0.000000e+00> : vector<8x128xf32>
    %3 = tpu.matmul %1, %2, %cst {dimension_numbers = #tpu.dot_dimension_numbers<[1], [0], [0], [1], [0, 0, 1, 1], [], []>} : vector<8x256xbf16>, vector<256x128xbf16>, vector<8x128xf32> -> vector<8x128xf32>
    %4 = arith.mulf %0, %0 : vector<8x256xf32>
    %5 = arith.truncf %4 : vector<8x256xf32> to vector<8x256xbf16>
    %cst_3 = arith.constant dense<0.000000e+00> : vector<8x128xf32>
    %6 = tpu.matmul %5, %2, %cst_3 {dimension_numbers = #tpu.dot_dimension_numbers<[1], [0], [0], [1], [0, 0, 1, 1], [], []>} : vector<8x256xbf16>, vector<256x128xbf16>, vector<8x128xf32> -> vector<8x128xf32>
    %cst_4 = arith.constant 1.562500e-02 : f32
    %7 = vector.broadcast %cst_4 : f32 to vector<8x128xf32>
    %8 = arith.mulf %3, %7 : vector<8x128xf32>
    %cst_5 = arith.constant 1.562500e-02 : f32
    %9 = vector.broadcast %cst_5 : f32 to vector<8x128xf32>
    %10 = arith.mulf %6, %9 : vector<8x128xf32>
    %11 = arith.mulf %8, %8 : vector<8x128xf32>
    %12 = arith.subf %10, %11 : vector<8x128xf32>
    %cst_6 = arith.constant 0.000000e+00 : f32
    %13 = vector.broadcast %cst_6 : f32 to vector<8x128xf32>
    %14 = arith.maximumf %12, %13 : vector<8x128xf32>
    %cst_7 = arith.constant 9.99999974E-6 : f32
    %15 = vector.broadcast %cst_7 : f32 to vector<8x128xf32>
    %16 = arith.addf %14, %15 : vector<8x128xf32>
    %17 = math.rsqrt %16 : vector<8x128xf32>
    %c0_8 = arith.constant 0 : index
    %c0_9 = arith.constant 0 : index
    %18 = vector.load %arg3[%c0_8, %c0_9] : memref<128x256xbf16, #tpu.memory_space<vmem>>, vector<128x256xbf16>
    %19 = arith.truncf %8 : vector<8x128xf32> to vector<8x128xbf16>
    %cst_10 = arith.constant dense<0.000000e+00> : vector<8x256xf32>
    %20 = tpu.matmul %19, %18, %cst_10 {dimension_numbers = #tpu.dot_dimension_numbers<[1], [0], [0], [1], [0, 0, 1, 1], [], []>} : vector<8x128xbf16>, vector<128x256xbf16>, vector<8x256xf32> -> vector<8x256xf32>
    %21 = arith.truncf %17 : vector<8x128xf32> to vector<8x128xbf16>
    %cst_11 = arith.constant dense<0.000000e+00> : vector<8x256xf32>
    %22 = tpu.matmul %21, %18, %cst_11 {dimension_numbers = #tpu.dot_dimension_numbers<[1], [0], [0], [1], [0, 0, 1, 1], [], []>} : vector<8x128xbf16>, vector<128x256xbf16>, vector<8x256xf32> -> vector<8x256xf32>
    %23 = arith.subf %0, %20 : vector<8x256xf32>
    %24 = arith.mulf %23, %22 : vector<8x256xf32>
    %25 = arith.truncf %24 : vector<8x256xf32> to vector<8x256xbf16>
    %c0_12 = arith.constant 0 : index
    %c0_13 = arith.constant 0 : index
    %26 = vector.load %arg4[%c0_12, %c0_13] : memref<256x128xbf16, #tpu.memory_space<vmem>>, vector<256x128xbf16>
    %cst_14 = arith.constant dense<0.000000e+00> : vector<8x128xf32>
    %27 = tpu.matmul %25, %26, %cst_14 {dimension_numbers = #tpu.dot_dimension_numbers<[1], [0], [0], [1], [0, 0, 1, 1], [], []>} : vector<8x256xbf16>, vector<256x128xbf16>, vector<8x128xf32> -> vector<8x128xf32>
    %c0_15 = arith.constant 0 : index
    %c0_16 = arith.constant 0 : index
    %28 = vector.load %arg5[%c0_15, %c0_16] : memref<1x128xf32, #tpu.memory_space<vmem>>, vector<1x128xf32>
    %29 = vector.broadcast %28 : vector<1x128xf32> to vector<8x128xf32>
    %30 = arith.addf %27, %29 : vector<8x128xf32>
    %c0_17 = arith.constant 0 : index
    %c0_18 = arith.constant 0 : index
    %31 = vector.load %arg6[%c0_17, %c0_18] : memref<8x128xf32, #tpu.memory_space<vmem>>, vector<8x128xf32>
    tpu.vector_store %arg6[%c0_17, %c0_18], %30 {strides = array<i32>} : memref<8x128xf32, #tpu.memory_space<vmem>>, vector<8x128xf32>,
    return
  }
  func.func @transform_0(%arg0: i32) -> (i32, i32) {
    %c0_i32 = arith.constant 0 : i32
    %c0_i32_0 = arith.constant 0 : i32
    return %arg0, %c0_i32 : i32, i32
  }
  func.func @transform_1(%arg0: i32) -> (i32, i32) {
    %c0_i32 = arith.constant 0 : i32
    %c0_i32_0 = arith.constant 0 : i32
    %c0_i32_1 = arith.constant 0 : i32
    return %c0_i32, %c0_i32_0 : i32, i32
  }
  func.func @transform_2(%arg0: i32) -> (i32, i32) {
    %c0_i32 = arith.constant 0 : i32
    %c0_i32_0 = arith.constant 0 : i32
    %c0_i32_1 = arith.constant 0 : i32
    return %c0_i32, %c0_i32_0 : i32, i32
  }
  func.func @transform_3(%arg0: i32) -> (i32, i32) {
    %c0_i32 = arith.constant 0 : i32
    %c0_i32_0 = arith.constant 0 : i32
    %c0_i32_1 = arith.constant 0 : i32
    return %c0_i32, %c0_i32_0 : i32, i32
  }
  func.func @transform_4(%arg0: i32) -> (i32, i32) {
    %c0_i32 = arith.constant 0 : i32
    %c0_i32_0 = arith.constant 0 : i32
    %c0_i32_1 = arith.constant 0 : i32
    return %c0_i32, %c0_i32_0 : i32, i32
  }
  func.func @transform_5(%arg0: i32) -> (i32, i32) {
    %c0_i32 = arith.constant 0 : i32
    %c0_i32_0 = arith.constant 0 : i32
    return %arg0, %c0_i32 : i32, i32
  }
}

</mosaic_0001>

<llo_original>
// kernel: tpu_custom_call.1
$region0: #{tpu_custom_call.1}
  #allocation0 [shape = 'u32[]', space=smem, size = 0x4, offset = 0x4, fixed_abs, tag = 'smem constant byte address 0x4 - core index']
  #allocation1 [shape = 'u32[144,128]{1,0:T(1,128)}', space=vmem, size = 0x12000, scoped, tag = 'internal scratch']
  %s0 = inlined_call_operand.hbm [shape: f32[8,256], index: 0, kind: input, shape index: {}]
  %s1 = inlined_call_operand.hbm [shape: bf16[256,128], index: 1, kind: input, shape index: {}]
  %s2 = inlined_call_operand.hbm [shape: bf16[128,256], index: 2, kind: input, shape index: {}]
  %s3 = inlined_call_operand.hbm [shape: bf16[256,128], index: 3, kind: input, shape index: {}]
  %s4 = inlined_call_operand.vmem [shape: f32[1,128], index: 4, kind: input, shape index: {}]
  %s5 = inlined_call_operand.hbm [shape: f32[8,128], index: 5, kind: output, shape index: {}]
  %s6 = sld [smem:[#allocation0]]
  $region46: #{tpu_custom_call.1} parent=0
    _
  %s8 = ssub.s32 1, %s6
  %s9 = scalar_select 0, %s8, %s6
  $region1: #{tpu_custom_call.1} parent=0
    #allocation2 [shape = 'u8[8192]{0}', space=vmem, size = 0x2000, scoped, tag = 'input window, operand 0, single buffered']
    #allocation3 [shape = 's32[1]{0}', space=sflag, size = 0x4, scoped, tag = 'scoped memory for tpu_custom_call.1']
    #allocation4 [shape = 's32[1]{0}', space=sflag, size = 0x4, scoped, tag = 'scoped memory for tpu_custom_call.1']
    #allocation5 [shape = 'u8[65536]{0}', space=vmem, size = 0x10000, scoped, tag = 'input window, operand 1, single buffered']
    #allocation6 [shape = 's32[1]{0}', space=sflag, size = 0x4, scoped, tag = 'scoped memory for tpu_custom_call.1']
    #allocation7 [shape = 'u8[65536]{0}', space=vmem, size = 0x10000, scoped, tag = 'input window, operand 2, single buffered']
    #allocation8 [shape = 'u8[65536]{0}', space=vmem, size = 0x10000, scoped, tag = 'input window, operand 3, single buffered']
    #allocation9 [shape = 's32[1]{0}', space=sflag, size = 0x4, scoped, tag = 'scoped memory for tpu_custom_call.1']
    #allocation10 [shape = 'u8[4096]{0}', space=vmem, size = 0x1000, scoped, tag = 'output window, operand 0, single buffered']
    %10 = vsyncpa [#allocation3], 0
    %11 = vsyncpa [#allocation6], 0
    %12 = vsyncpa [#allocation9], 0
    %13 = vsyncpa [#allocation4], 0
    // Predicated region
    $region2: #{tpu_custom_call.1} parent=1 // pred_check
      _
    $region3: #{tpu_custom_call.1} parent=1 // pred_check_branch
      %15 = sbr.rel (0) target = $region5
    $region4: #{tpu_custom_call.1} parent=1 // pred_region
      %s17 = ssub.s32 256, 256
      %18 = vsyncadd [#allocation3], %s17
      %s20 = sshll.u32 [#allocation2], 4
      %s21 = int_to_ptr.vmem [resolvable:$true] %s20
      %23 = dma.hbm_to_vmem [thread:$0]  %s0, 256, %s21, [#allocation3]
    $region5: #{tpu_custom_call.1} parent=1 // pred_fallthru
      _
    // Predicated region
    $region6: #{tpu_custom_call.1} parent=1 // pred_check
      _
    $region7: #{tpu_custom_call.1} parent=1 // pred_check_branch
      %25 = sbr.rel (0) target = $region9
    $region8: #{tpu_custom_call.1} parent=1 // pred_region
      %s27 = ssub.s32 2048, 2048
      %28 = vsyncadd [#allocation6], %s27
      %s29 = sshll.u32 [#allocation5], 4
      %s30 = int_to_ptr.vmem [resolvable:$true] %s29
      %35 = dma.hbm_to_vmem [thread:$0]  %s1, 2048, %s30, [#allocation6], 64, 64, 4
    $region9: #{tpu_custom_call.1} parent=1 // pred_fallthru
      _
    // Predicated region
    $region10: #{tpu_custom_call.1} parent=1 // pred_check
      _
    $region11: #{tpu_custom_call.1} parent=1 // pred_check_branch
      %37 = sbr.rel (0) target = $region13
    $region12: #{tpu_custom_call.1} parent=1 // pred_region
      %s39 = ssub.s32 2048, 2048
      %40 = vsyncadd [#allocation6], %s39
      %s41 = sshll.u32 [#allocation7], 4
      %s42 = int_to_ptr.vmem [resolvable:$true] %s41
      %47 = dma.hbm_to_vmem [thread:$0]  %s2, 2048, %s42, [#allocation6], 128, 128, 8
    $region13: #{tpu_custom_call.1} parent=1 // pred_fallthru
      _
    // Predicated region
    $region14: #{tpu_custom_call.1} parent=1 // pred_check
      _
    $region15: #{tpu_custom_call.1} parent=1 // pred_check_branch
      %49 = sbr.rel (0) target = $region17
    $region16: #{tpu_custom_call.1} parent=1 // pred_region
      %s51 = ssub.s32 2048, 2048
      %52 = vsyncadd [#allocation9], %s51
      %s53 = sshll.u32 [#allocation8], 4
      %s54 = int_to_ptr.vmem [resolvable:$true] %s53
      %59 = dma.hbm_to_vmem [thread:$0]  %s3, 2048, %s54, [#allocation9], 64, 64, 4
    $region17: #{tpu_custom_call.1} parent=1 // pred_fallthru
      _
    // Predicated region
    $region18: #{tpu_custom_call.1} parent=1 // pred_check
      _
    $region19: #{tpu_custom_call.1} parent=1 // pred_check_branch
      %61 = sbr.rel (0) target = $region21
    $region20: #{tpu_custom_call.1} parent=1 // pred_region
      _
    $region21: #{tpu_custom_call.1} parent=1 // pred_fallthru
      _
    // Predicated region
    $region22: #{tpu_custom_call.1} parent=1 // pred_check
      _
    $region23: #{tpu_custom_call.1} parent=1 // pred_check_branch
      %63 = sbr.rel (0) target = $region25
    $region24: #{tpu_custom_call.1} parent=1 // pred_region
      %64 = dma.done [#allocation3], 256
    $region25: #{tpu_custom_call.1} parent=1 // pred_fallthru
      _
    // Predicated region
    $region26: #{tpu_custom_call.1} parent=1 // pred_check
      _
    $region27: #{tpu_custom_call.1} parent=1 // pred_check_branch
      %66 = sbr.rel (0) target = $region29
    $region28: #{tpu_custom_call.1} parent=1 // pred_region
      %67 = dma.done [#allocation6], 2048
    $region29: #{tpu_custom_call.1} parent=1 // pred_fallthru
      _
    // Predicated region
    $region30: #{tpu_custom_call.1} parent=1 // pred_check
      _
    $region31: #{tpu_custom_call.1} parent=1 // pred_check_branch
      %69 = sbr.rel (0) target = $region33
    $region32: #{tpu_custom_call.1} parent=1 // pred_region
      %70 = dma.done [#allocation6], 2048
    $region33: #{tpu_custom_call.1} parent=1 // pred_fallthru
      _
    // Predicated region
    $region34: #{tpu_custom_call.1} parent=1 // pred_check
      _
    $region35: #{tpu_custom_call.1} parent=1 // pred_check_branch
      %72 = sbr.rel (0) target = $region37
    $region36: #{tpu_custom_call.1} parent=1 // pred_region
      %73 = dma.done [#allocation9], 2048
    $region37: #{tpu_custom_call.1} parent=1 // pred_fallthru
      _
    %v75 = vld [vmem:[#allocation2] sm:$0xff]
    %v76 = vld [vmem:[#allocation2 + $0x8] sm:$0xff]
    %v77 = vpack.c.bf16 %v75, %v75
    %v78 = vpack.c.bf16 %v76, %v76
    %v79 = vld [vmem:[#allocation5] sm:$0xf]
    %v80 = vld [vmem:[#allocation5 + $0x4] sm:$0xf]
    %v81 = vld [vmem:[#allocation5 + $0x8] sm:$0xf]
    %v82 = vld [vmem:[#allocation5 + $0xc] sm:$0xf]
    %v83 = vld [vmem:[#allocation5 + $0x10] sm:$0xf]
    %v84 = vld [vmem:[#allocation5 + $0x14] sm:$0xf]
    %v85 = vld [vmem:[#allocation5 + $0x18] sm:$0xf]
    %v86 = vld [vmem:[#allocation5 + $0x1c] sm:$0xf]
    %v87 = vld [vmem:[#allocation5 + $0x20] sm:$0xf]
    %v88 = vld [vmem:[#allocation5 + $0x24] sm:$0xf]
    %v89 = vld [vmem:[#allocation5 + $0x28] sm:$0xf]
    %v90 = vld [vmem:[#allocation5 + $0x2c] sm:$0xf]
    %v91 = vld [vmem:[#allocation5 + $0x30] sm:$0xf]
    %v92 = vld [vmem:[#allocation5 + $0x34] sm:$0xf]
    %v93 = vld [vmem:[#allocation5 + $0x38] sm:$0xf]
    %v94 = vld [vmem:[#allocation5 + $0x3c] sm:$0xf]
    %v95 = vld [vmem:[#allocation5 + $0x40] sm:$0xf]
    %v96 = vld [vmem:[#allocation5 + $0x44] sm:$0xf]
    %v97 = vld [vmem:[#allocation5 + $0x48] sm:$0xf]
    %v98 = vld [vmem:[#allocation5 + $0x4c] sm:$0xf]
    %v99 = vld [vmem:[#allocation5 + $0x50] sm:$0xf]
    %v100 = vld [vmem:[#allocation5 + $0x54] sm:$0xf]
    %v101 = vld [vmem:[#allocation5 + $0x58] sm:$0xf]
    %v102 = vld [vmem:[#allocation5 + $0x5c] sm:$0xf]
    %v103 = vld [vmem:[#allocation5 + $0x60] sm:$0xf]
    %v104 = vld [vmem:[#allocation5 + $0x64] sm:$0xf]
    %v105 = vld [vmem:[#allocation5 + $0x68] sm:$0xf]
    %v106 = vld [vmem:[#allocation5 + $0x6c] sm:$0xf]
    %v107 = vld [vmem:[#allocation5 + $0x70] sm:$0xf]
    %v108 = vld [vmem:[#allocation5 + $0x74] sm:$0xf]
    %v109 = vld [vmem:[#allocation5 + $0x78] sm:$0xf]
    %v110 = vld [vmem:[#allocation5 + $0x7c] sm:$0xf]
    %v143 = vunpack.c.l.b16 %v79
    %v144 = vunpack.c.l.b16 %v80
    %v145 = vunpack.c.l.b16 %v81
    %v146 = vunpack.c.l.b16 %v82
    %v147 = vunpack.c.l.b16 %v83
    %v148 = vunpack.c.l.b16 %v84
    %v149 = vunpack.c.l.b16 %v85
    %v150 = vunpack.c.l.b16 %v86
    %v151 = vunpack.c.l.b16 %v87
    %v152 = vunpack.c.l.b16 %v88
    %v153 = vunpack.c.l.b16 %v89
    %v154 = vunpack.c.l.b16 %v90
    %v155 = vunpack.c.l.b16 %v91
    %v156 = vunpack.c.l.b16 %v92
    %v157 = vunpack.c.l.b16 %v93
    %v158 = vunpack.c.l.b16 %v94
    %v159 = vunpack.c.l.b16 %v95
    %v160 = vunpack.c.l.b16 %v96
    %v161 = vunpack.c.l.b16 %v97
    %v162 = vunpack.c.l.b16 %v98
    %v163 = vunpack.c.l.b16 %v99
    %v164 = vunpack.c.l.b16 %v100
    %v165 = vunpack.c.l.b16 %v101
    %v166 = vunpack.c.l.b16 %v102
    %v167 = vunpack.c.l.b16 %v103
    %v168 = vunpack.c.l.b16 %v104
    %v169 = vunpack.c.l.b16 %v105
    %v170 = vunpack.c.l.b16 %v106
    %v171 = vunpack.c.l.b16 %v107
    %v172 = vunpack.c.l.b16 %v108
    %v173 = vunpack.c.l.b16 %v109
    %v174 = vunpack.c.l.b16 %v110
    %v175 = vpack.c.b16 %v144, %v143
    %v176 = vpack.c.b16 %v146, %v145
    %v177 = vpack.c.b16 %v148, %v147
    %v178 = vpack.c.b16 %v150, %v149
    %v179 = vpack.c.b16 %v152, %v151
    %v180 = vpack.c.b16 %v154, %v153
    %v181 = vpack.c.b16 %v156, %v155
    %v182 = vpack.c.b16 %v158, %v157
    %v183 = vpack.c.b16 %v160, %v159
    %v184 = vpack.c.b16 %v162, %v161
    %v185 = vpack.c.b16 %v164, %v163
    %v186 = vpack.c.b16 %v166, %v165
    %v187 = vpack.c.b16 %v168, %v167
    %v188 = vpack.c.b16 %v170, %v169
    %v189 = vpack.c.b16 %v172, %v171
    %v190 = vpack.c.b16 %v174, %v173
    %207 = vmatprep.subr.bf16.mxu0 0
    %208 = vmatpush1.bf16.msra.mxu0 %v182
    %209 = vmatprep.subr.bf16.mxu0 0
    %210 = vmatpush1.bf16.msra.mxu0 %v181
    %211 = vmatprep.subr.bf16.mxu0 0
    %212 = vmatpush1.bf16.msra.mxu0 %v180
    %213 = vmatprep.subr.bf16.mxu0 0
    %214 = vmatpush1.bf16.msra.mxu0 %v179
    %215 = vmatprep.subr.bf16.mxu0 0
    %216 = vmatpush1.bf16.msra.mxu0 %v178
    %217 = vmatprep.subr.bf16.mxu0 0
    %218 = vmatpush1.bf16.msra.mxu0 %v177
    %219 = vmatprep.subr.bf16.mxu0 0
    %220 = vmatpush1.bf16.msra.mxu0 %v176
    %221 = vmatprep.subr.bf16.mxu0 0
    %222 = vmatpush1.bf16.msra.mxu0 %v175
    %223 = vmatprep.subr.bf16.mxu0 0
    %224 = vmatpush2.bf16.msra.mxu0 %v190
    %225 = vmatprep.subr.bf16.mxu0 0
    %226 = vmatpush2.bf16.msra.mxu0 %v189
    %227 = vmatprep.subr.bf16.mxu0 0
    %228 = vmatpush2.bf16.msra.mxu0 %v188
    %229 = vmatprep.subr.bf16.mxu0 0
    %230 = vmatpush2.bf16.msra.mxu0 %v187
    %231 = vmatprep.subr.bf16.mxu0 0
    %232 = vmatpush2.bf16.msra.mxu0 %v186
    %233 = vmatprep.subr.bf16.mxu0 0
    %234 = vmatpush2.bf16.msra.mxu0 %v185
    %235 = vmatprep.subr.bf16.mxu0 0
    %236 = vmatpush2.bf16.msra.mxu0 %v184
    %237 = vmatprep.subr.bf16.mxu0 0
    %238 = vmatpush2.bf16.msra.mxu0 %v183
    %239 = vmatprep.mubr.bf16.mxu0 %v78
    %240 = vmatmul.mubr.bf16.gmra.mxu0 %v77
    %v241 = vpop.f32.mrf.mxu0
    %v242 = vadd.f32 0.0, %v241
    %v243 = vpop.f32.mrf.mxu0
    %v244 = vpop.f32.mrf.mxu0
    %v245 = vpop.f32.mrf.mxu0
    %246 = vdwg.mxu0
    %v247 = vmul.f32 %v75, %v75
    %v248 = vmul.f32 %v76, %v76
    %v249 = vpack.c.bf16 %v247, %v247
    %v250 = vpack.c.bf16 %v248, %v248
    %251 = vmatprep.subr.bf16.mxu0 0
    %252 = vmatpush1.bf16.msra.mxu0 %v182
    %253 = vmatprep.subr.bf16.mxu0 0
    %254 = vmatpush1.bf16.msra.mxu0 %v181
    %255 = vmatprep.subr.bf16.mxu0 0
    %256 = vmatpush1.bf16.msra.mxu0 %v180
    %257 = vmatprep.subr.bf16.mxu0 0
    %258 = vmatpush1.bf16.msra.mxu0 %v179
    %259 = vmatprep.subr.bf16.mxu0 0
    %260 = vmatpush1.bf16.msra.mxu0 %v178
    %261 = vmatprep.subr.bf16.mxu0 0
    %262 = vmatpush1.bf16.msra.mxu0 %v177
    %263 = vmatprep.subr.bf16.mxu0 0
    %264 = vmatpush1.bf16.msra.mxu0 %v176
    %265 = vmatprep.subr.bf16.mxu0 0
    %266 = vmatpush1.bf16.msra.mxu0 %v175
    %267 = vmatprep.subr.bf16.mxu0 0
    %268 = vmatpush2.bf16.msra.mxu0 %v190
    %269 = vmatprep.subr.bf16.mxu0 0
    %270 = vmatpush2.bf16.msra.mxu0 %v189
    %271 = vmatprep.subr.bf16.mxu0 0
    %272 = vmatpush2.bf16.msra.mxu0 %v188
    %273 = vmatprep.subr.bf16.mxu0 0
    %274 = vmatpush2.bf16.msra.mxu0 %v187
    %275 = vmatprep.subr.bf16.mxu0 0
    %276 = vmatpush2.bf16.msra.mxu0 %v186
    %277 = vmatprep.subr.bf16.mxu0 0
    %278 = vmatpush2.bf16.msra.mxu0 %v185
    %279 = vmatprep.subr.bf16.mxu0 0
    %280 = vmatpush2.bf16.msra.mxu0 %v184
    %281 = vmatprep.subr.bf16.mxu0 0
    %282 = vmatpush2.bf16.msra.mxu0 %v183
    %283 = vmatprep.mubr.bf16.mxu0 %v250
    %284 = vmatmul.mubr.bf16.gmra.mxu0 %v249
    %v285 = vpop.f32.mrf.mxu0
    %v286 = vadd.f32 0.0, %v285
    %v287 = vpop.f32.mrf.mxu0
    %v288 = vpop.f32.mrf.mxu0
    %v289 = vpop.f32.mrf.mxu0
    %290 = vdwg.mxu0
    %v291 = vmul.f32 %v242, 0.015625
    %v292 = vmul.f32 %v286, 0.015625
    %v293 = vmul.f32 %v291, %v291
    %v294 = vsub.f32 %v292, %v293
    %v295 = vmax.f32 %v294, 0.0
    %v296 = vadd.f32 %v295, 1e-05
    %v297 = vrsqrt.pop %v296
    %v298 = vld [vmem:[#allocation7] sm:$0xff]
    %v299 = vld [vmem:[#allocation7 + $0x8] sm:$0xff]
    %v300 = vld [vmem:[#allocation7 + $0x10] sm:$0xff]
    %v301 = vld [vmem:[#allocation7 + $0x18] sm:$0xff]
    %v302 = vld [vmem:[#allocation7 + $0x20] sm:$0xff]
    %v303 = vld [vmem:[#allocation7 + $0x28] sm:$0xff]
    %v304 = vld [vmem:[#allocation7 + $0x30] sm:$0xff]
    %v305 = vld [vmem:[#allocation7 + $0x38] sm:$0xff]
    %v306 = vld [vmem:[#allocation7 + $0x40] sm:$0xff]
    %v307 = vld [vmem:[#allocation7 + $0x48] sm:$0xff]
    %v308 = vld [vmem:[#allocation7 + $0x50] sm:$0xff]
    %v309 = vld [vmem:[#allocation7 + $0x58] sm:$0xff]
    %v310 = vld [vmem:[#allocation7 + $0x60] sm:$0xff]
    %v311 = vld [vmem:[#allocation7 + $0x68] sm:$0xff]
    %v312 = vld [vmem:[#allocation7 + $0x70] sm:$0xff]
    %v313 = vld [vmem:[#allocation7 + $0x78] sm:$0xff]
    %v314 = vpack.c.bf16 %v291, %v291
    %v331 = vunpack.c.l.b16 %v298
    %v332 = vunpack.c.h.b16 %v298
    %v333 = vunpack.c.l.b16 %v299
    %v334 = vunpack.c.h.b16 %v299
    %v335 = vunpack.c.l.b16 %v300
    %v336 = vunpack.c.h.b16 %v300
    %v337 = vunpack.c.l.b16 %v301
    %v338 = vunpack.c.h.b16 %v301
    %v339 = vunpack.c.l.b16 %v302
    %v340 = vunpack.c.h.b16 %v302
    %v341 = vunpack.c.l.b16 %v303
    %v342 = vunpack.c.h.b16 %v303
    %v343 = vunpack.c.l.b16 %v304
    %v344 = vunpack.c.h.b16 %v304
    %v345 = vunpack.c.l.b16 %v305
    %v346 = vunpack.c.h.b16 %v305
    %v347 = vunpack.c.l.b16 %v306
    %v348 = vunpack.c.h.b16 %v306
    %v349 = vunpack.c.l.b16 %v307
    %v350 = vunpack.c.h.b16 %v307
    %v351 = vunpack.c.l.b16 %v308
    %v352 = vunpack.c.h.b16 %v308
    %v353 = vunpack.c.l.b16 %v309
    %v354 = vunpack.c.h.b16 %v309
    %v355 = vunpack.c.l.b16 %v310
    %v356 = vunpack.c.h.b16 %v310
    %v357 = vunpack.c.l.b16 %v311
    %v358 = vunpack.c.h.b16 %v311
    %v359 = vunpack.c.l.b16 %v312
    %v360 = vunpack.c.h.b16 %v312
    %v361 = vunpack.c.l.b16 %v313
    %v362 = vunpack.c.h.b16 %v313
    %v363 = vpack.c.b16 %v333, %v331
    %v364 = vpack.c.b16 %v334, %v332
    %v365 = vpack.c.b16 %v337, %v335
    %v366 = vpack.c.b16 %v338, %v336
    %v367 = vpack.c.b16 %v341, %v339
    %v368 = vpack.c.b16 %v342, %v340
    %v369 = vpack.c.b16 %v345, %v343
    %v370 = vpack.c.b16 %v346, %v344
    %v371 = vpack.c.b16 %v349, %v347
    %v372 = vpack.c.b16 %v350, %v348
    %v373 = vpack.c.b16 %v353, %v351
    %v374 = vpack.c.b16 %v354, %v352
    %v375 = vpack.c.b16 %v357, %v355
    %v376 = vpack.c.b16 %v358, %v356
    %v377 = vpack.c.b16 %v361, %v359
    %v378 = vpack.c.b16 %v362, %v360
    %395 = vmatprep.subr.bf16.mxu0 %v378
    %396 = vmatpush1.bf16.msra.mxu0 %v377
    %397 = vmatprep.subr.bf16.mxu0 %v376
    %398 = vmatpush1.bf16.msra.mxu0 %v375
    %399 = vmatprep.subr.bf16.mxu0 %v374
    %400 = vmatpush1.bf16.msra.mxu0 %v373
    %401 = vmatprep.subr.bf16.mxu0 %v372
    %402 = vmatpush1.bf16.msra.mxu0 %v371
    %403 = vmatprep.subr.bf16.mxu0 %v370
    %404 = vmatpush1.bf16.msra.mxu0 %v369
    %405 = vmatprep.subr.bf16.mxu0 %v368
    %406 = vmatpush1.bf16.msra.mxu0 %v367
    %407 = vmatprep.subr.bf16.mxu0 %v366
    %408 = vmatpush1.bf16.msra.mxu0 %v365
    %409 = vmatprep.subr.bf16.mxu0 %v364
    %410 = vmatpush1.bf16.msra.mxu0 %v363
    %411 = vmatprep.subr.bf16.mxu0 0
    %412 = vmatpush2.bf16.msra.mxu0 0
    %413 = vmatprep.subr.bf16.mxu0 0
    %414 = vmatpush2.bf16.msra.mxu0 0
    %415 = vmatprep.subr.bf16.mxu0 0
    %416 = vmatpush2.bf16.msra.mxu0 0
    %417 = vmatprep.subr.bf16.mxu0 0
    %418 = vmatpush2.bf16.msra.mxu0 0
    %419 = vmatprep.subr.bf16.mxu0 0
    %420 = vmatpush2.bf16.msra.mxu0 0
    %421 = vmatprep.subr.bf16.mxu0 0
    %422 = vmatpush2.bf16.msra.mxu0 0
    %423 = vmatprep.subr.bf16.mxu0 0
    %424 = vmatpush2.bf16.msra.mxu0 0
    %425 = vmatprep.subr.bf16.mxu0 0
    %426 = vmatpush2.bf16.msra.mxu0 0
    %427 = vmatprep.mubr.bf16.mxu0 0
    %428 = vmatmul.mubr.bf16.gmra.mxu0 %v314
    %v429 = vpop.f32.mrf.mxu0
    %v430 = vadd.f32 0.0, %v429
    %v431 = vpop.f32.mrf.mxu0
    %v432 = vadd.f32 0.0, %v431
    %v433 = vpop.f32.mrf.mxu0
    %v434 = vpop.f32.mrf.mxu0
    %435 = vdwg.mxu0
    %v436 = vpack.c.bf16 %v297, %v297
    %437 = vmatprep.subr.bf16.mxu0 %v378
    %438 = vmatpush1.bf16.msra.mxu0 %v377
    %439 = vmatprep.subr.bf16.mxu0 %v376
    %440 = vmatpush1.bf16.msra.mxu0 %v375
    %441 = vmatprep.subr.bf16.mxu0 %v374
    %442 = vmatpush1.bf16.msra.mxu0 %v373
    %443 = vmatprep.subr.bf16.mxu0 %v372
    %444 = vmatpush1.bf16.msra.mxu0 %v371
    %445 = vmatprep.subr.bf16.mxu0 %v370
    %446 = vmatpush1.bf16.msra.mxu0 %v369
    %447 = vmatprep.subr.bf16.mxu0 %v368
    %448 = vmatpush1.bf16.msra.mxu0 %v367
    %449 = vmatprep.subr.bf16.mxu0 %v366
    %450 = vmatpush1.bf16.msra.mxu0 %v365
    %451 = vmatprep.subr.bf16.mxu0 %v364
    %452 = vmatpush1.bf16.msra.mxu0 %v363
    %453 = vmatprep.subr.bf16.mxu0 0
    %454 = vmatpush2.bf16.msra.mxu0 0
    %455 = vmatprep.subr.bf16.mxu0 0
    %456 = vmatpush2.bf16.msra.mxu0 0
    %457 = vmatprep.subr.bf16.mxu0 0
    %458 = vmatpush2.bf16.msra.mxu0 0
    %459 = vmatprep.subr.bf16.mxu0 0
    %460 = vmatpush2.bf16.msra.mxu0 0
    %461 = vmatprep.subr.bf16.mxu0 0
    %462 = vmatpush2.bf16.msra.mxu0 0
    %463 = vmatprep.subr.bf16.mxu0 0
    %464 = vmatpush2.bf16.msra.mxu0 0
    %465 = vmatprep.subr.bf16.mxu0 0
    %466 = vmatpush2.bf16.msra.mxu0 0
    %467 = vmatprep.subr.bf16.mxu0 0
    %468 = vmatpush2.bf16.msra.mxu0 0
    %469 = vmatprep.mubr.bf16.mxu0 0
    %470 = vmatmul.mubr.bf16.gmra.mxu0 %v436
    %v471 = vpop.f32.mrf.mxu0
    %v472 = vadd.f32 0.0, %v471
    %v473 = vpop.f32.mrf.mxu0
    %v474 = vadd.f32 0.0, %v473
    %v475 = vpop.f32.mrf.mxu0
    %v476 = vpop.f32.mrf.mxu0
    %477 = vdwg.mxu0
    %v478 = vsub.f32 %v75, %v430
    %v479 = vsub.f32 %v76, %v432
    %v480 = vmul.f32 %v478, %v472
    %v481 = vmul.f32 %v479, %v474
    %v482 = vpack.c.bf16 %v480, %v480
    %v483 = vpack.c.bf16 %v481, %v481
    %v484 = vld [vmem:[#allocation8] sm:$0xf]
    %v485 = vld [vmem:[#allocation8 + $0x4] sm:$0xf]
    %v486 = vld [vmem:[#allocation8 + $0x8] sm:$0xf]
    %v487 = vld [vmem:[#allocation8 + $0xc] sm:$0xf]
    %v488 = vld [vmem:[#allocation8 + $0x10] sm:$0xf]
    %v489 = vld [vmem:[#allocation8 + $0x14] sm:$0xf]
    %v490 = vld [vmem:[#allocation8 + $0x18] sm:$0xf]
    %v491 = vld [vmem:[#allocation8 + $0x1c] sm:$0xf]
    %v492 = vld [vmem:[#allocation8 + $0x20] sm:$0xf]
    %v493 = vld [vmem:[#allocation8 + $0x24] sm:$0xf]
    %v494 = vld [vmem:[#allocation8 + $0x28] sm:$0xf]
    %v495 = vld [vmem:[#allocation8 + $0x2c] sm:$0xf]
    %v496 = vld [vmem:[#allocation8 + $0x30] sm:$0xf]
    %v497 = vld [vmem:[#allocation8 + $0x34] sm:$0xf]
    %v498 = vld [vmem:[#allocation8 + $0x38] sm:$0xf]
    %v499 = vld [vmem:[#allocation8 + $0x3c] sm:$0xf]
    %v500 = vld [vmem:[#allocation8 + $0x40] sm:$0xf]
    %v501 = vld [vmem:[#allocation8 + $0x44] sm:$0xf]
    %v502 = vld [vmem:[#allocation8 + $0x48] sm:$0xf]
    %v503 = vld [vmem:[#allocation8 + $0x4c] sm:$0xf]
    %v504 = vld [vmem:[#allocation8 + $0x50] sm:$0xf]
    %v505 = vld [vmem:[#allocation8 + $0x54] sm:$0xf]
    %v506 = vld [vmem:[#allocation8 + $0x58] sm:$0xf]
    %v507 = vld [vmem:[#allocation8 + $0x5c] sm:$0xf]
    %v508 = vld [vmem:[#allocation8 + $0x60] sm:$0xf]
    %v509 = vld [vmem:[#allocation8 + $0x64] sm:$0xf]
    %v510 = vld [vmem:[#allocation8 + $0x68] sm:$0xf]
    %v511 = vld [vmem:[#allocation8 + $0x6c] sm:$0xf]
    %v512 = vld [vmem:[#allocation8 + $0x70] sm:$0xf]
    %v513 = vld [vmem:[#allocation8 + $0x74] sm:$0xf]
    %v514 = vld [vmem:[#allocation8 + $0x78] sm:$0xf]
    %v515 = vld [vmem:[#allocation8 + $0x7c] sm:$0xf]
    %v516 = vld [vmem:[%s4] sm:$0x1]
    %v518 = vlaneseq
    %v519 = vshrl.u32 %v518, 7
    %v520 = vsub.s32 0, %v519
    %v521 = vrot.slane %v516, %v520
    %v555 = vunpack.c.l.b16 %v484
    %v556 = vunpack.c.l.b16 %v485
    %v557 = vunpack.c.l.b16 %v486
    %v558 = vunpack.c.l.b16 %v487
    %v559 = vunpack.c.l.b16 %v488
    %v560 = vunpack.c.l.b16 %v489
    %v561 = vunpack.c.l.b16 %v490
    %v562 = vunpack.c.l.b16 %v491
    %v563 = vunpack.c.l.b16 %v492
    %v564 = vunpack.c.l.b16 %v493
    %v565 = vunpack.c.l.b16 %v494
    %v566 = vunpack.c.l.b16 %v495
    %v567 = vunpack.c.l.b16 %v496
    %v568 = vunpack.c.l.b16 %v497
    %v569 = vunpack.c.l.b16 %v498
    %v570 = vunpack.c.l.b16 %v499
    %v571 = vunpack.c.l.b16 %v500
    %v572 = vunpack.c.l.b16 %v501
    %v573 = vunpack.c.l.b16 %v502
    %v574 = vunpack.c.l.b16 %v503
    %v575 = vunpack.c.l.b16 %v504
    %v576 = vunpack.c.l.b16 %v505
    %v577 = vunpack.c.l.b16 %v506
    %v578 = vunpack.c.l.b16 %v507
    %v579 = vunpack.c.l.b16 %v508
    %v580 = vunpack.c.l.b16 %v509
    %v581 = vunpack.c.l.b16 %v510
    %v582 = vunpack.c.l.b16 %v511
    %v583 = vunpack.c.l.b16 %v512
    %v584 = vunpack.c.l.b16 %v513
    %v585 = vunpack.c.l.b16 %v514
    %v586 = vunpack.c.l.b16 %v515
    %v587 = vpack.c.b16 %v556, %v555
    %v588 = vpack.c.b16 %v558, %v557
    %v589 = vpack.c.b16 %v560, %v559
    %v590 = vpack.c.b16 %v562, %v561
    %v591 = vpack.c.b16 %v564, %v563
    %v592 = vpack.c.b16 %v566, %v565
    %v593 = vpack.c.b16 %v568, %v567
    %v594 = vpack.c.b16 %v570, %v569
    %v595 = vpack.c.b16 %v572, %v571
    %v596 = vpack.c.b16 %v574, %v573
    %v597 = vpack.c.b16 %v576, %v575
    %v598 = vpack.c.b16 %v578, %v577
    %v599 = vpack.c.b16 %v580, %v579
    %v600 = vpack.c.b16 %v582, %v581
    %v601 = vpack.c.b16 %v584, %v583
    %v602 = vpack.c.b16 %v586, %v585
    %619 = vmatprep.subr.bf16.mxu0 0
    %620 = vmatpush1.bf16.msra.mxu0 %v594
    %621 = vmatprep.subr.bf16.mxu0 0
    %622 = vmatpush1.bf16.msra.mxu0 %v593
    %623 = vmatprep.subr.bf16.mxu0 0
    %624 = vmatpush1.bf16.msra.mxu0 %v592
    %625 = vmatprep.subr.bf16.mxu0 0
    %626 = vmatpush1.bf16.msra.mxu0 %v591
    %627 = vmatprep.subr.bf16.mxu0 0
    %628 = vmatpush1.bf16.msra.mxu0 %v590
    %629 = vmatprep.subr.bf16.mxu0 0
    %630 = vmatpush1.bf16.msra.mxu0 %v589
    %631 = vmatprep.subr.bf16.mxu0 0
    %632 = vmatpush1.bf16.msra.mxu0 %v588
    %633 = vmatprep.subr.bf16.mxu0 0
    %634 = vmatpush1.bf16.msra.mxu0 %v587
    %635 = vmatprep.subr.bf16.mxu0 0
    %636 = vmatpush2.bf16.msra.mxu0 %v602
    %637 = vmatprep.subr.bf16.mxu0 0
    %638 = vmatpush2.bf16.msra.mxu0 %v601
    %639 = vmatprep.subr.bf16.mxu0 0
    %640 = vmatpush2.bf16.msra.mxu0 %v600
    %641 = vmatprep.subr.bf16.mxu0 0
    %642 = vmatpush2.bf16.msra.mxu0 %v599
    %643 = vmatprep.subr.bf16.mxu0 0
    %644 = vmatpush2.bf16.msra.mxu0 %v598
    %645 = vmatprep.subr.bf16.mxu0 0
    %646 = vmatpush2.bf16.msra.mxu0 %v597
    %647 = vmatprep.subr.bf16.mxu0 0
    %648 = vmatpush2.bf16.msra.mxu0 %v596
    %649 = vmatprep.subr.bf16.mxu0 0
    %650 = vmatpush2.bf16.msra.mxu0 %v595
    %651 = vmatprep.mubr.bf16.mxu0 %v483
    %652 = vmatmul.mubr.bf16.gmra.mxu0 %v482
    %v653 = vpop.f32.mrf.mxu0
    %v654 = vadd.f32 %v521, %v653
    %v655 = vpop.f32.mrf.mxu0
    %v656 = vpop.f32.mrf.mxu0
    %v657 = vpop.f32.mrf.mxu0
    %658 = vdwg.mxu0
    %659 = vst [vmem:[#allocation10] sm:$0xff] %v654
    // Predicated region
    $region38: #{tpu_custom_call.1} parent=1 // pred_check
      _
    $region39: #{tpu_custom_call.1} parent=1 // pred_check_branch
      %661 = sbr.rel (0) target = $region41
    $region40: #{tpu_custom_call.1} parent=1 // pred_region
      %s663 = ssub.s32 128, 128
      %664 = vsyncadd [#allocation4], %s663
      %s666 = sshll.u32 [#allocation10], 4
      %s667 = int_to_ptr.vmem [resolvable:$true] %s666
      %669 = dma.vmem_to_hbm [thread:$0]  %s667, 128, %s5, [#allocation4]
    $region41: #{tpu_custom_call.1} parent=1 // pred_fallthru
      _
    // Predicated region
    $region42: #{tpu_custom_call.1} parent=1 // pred_check
      _
    $region43: #{tpu_custom_call.1} parent=1 // pred_check_branch
      %671 = sbr.rel (0) target = $region45
    $region44: #{tpu_custom_call.1} parent=1 // pred_region
      %672 = dma.done [#allocation4], 128
    $region45: #{tpu_custom_call.1} parent=1 // pred_fallthru
      _
    %673 = vsyncpa [#allocation3], 1
    %674 = vsyncpa [#allocation6], 1
    %675 = vsyncpa [#allocation9], 1
    %676 = vsyncpa [#allocation4], 1

// kernel: tpu_custom_call.1
$region0: #{tpu_custom_call.1}
  #allocation0 [shape = 'u32[]', space=smem, size = 0x4, offset = 0x4, fixed_abs, tag = 'smem constant byte address 0x4 - core index']
  #allocation1 [shape = 'u32[144,128]{1,0:T(1,128)}', space=vmem, size = 0x12000, scoped, tag = 'internal scratch']
  %s0 = inlined_call_operand.hbm [shape: f32[8,256], index: 0, kind: input, shape index: {}]
  %s1 = inlined_call_operand.hbm [shape: bf16[256,128], index: 1, kind: input, shape index: {}]
  %s2 = inlined_call_operand.hbm [shape: bf16[128,256], index: 2, kind: input, shape index: {}]
  %s3 = inlined_call_operand.hbm [shape: bf16[256,128], index: 3, kind: input, shape index: {}]
  %s4 = inlined_call_operand.vmem [shape: f32[1,128], index: 4, kind: input, shape index: {}]
  %s5 = inlined_call_operand.hbm [shape: f32[8,128], index: 5, kind: output, shape index: {}]
  %s6 = sld [smem:[#allocation0]]
  $region46: #{tpu_custom_call.1} parent=0
    _
  %s8 = ssub.s32 1, %s6
  %s9 = scalar_select 0, %s8, %s6
  $region1: #{tpu_custom_call.1} parent=0
    #allocation2 [shape = 'u8[8192]{0}', space=vmem, size = 0x2000, scoped, tag = 'input window, operand 0, single buffered']
    #allocation3 [shape = 's32[1]{0}', space=sflag, size = 0x4, scoped, tag = 'scoped memory for tpu_custom_call.1']
    #allocation4 [shape = 's32[1]{0}', space=sflag, size = 0x4, scoped, tag = 'scoped memory for tpu_custom_call.1']
    #allocation5 [shape = 'u8[65536]{0}', space=vmem, size = 0x10000, scoped, tag = 'input window, operand 1, single buffered']
    #allocation6 [shape = 's32[1]{0}', space=sflag, size = 0x4, scoped, tag = 'scoped memory for tpu_custom_call.1']
    #allocation7 [shape = 'u8[65536]{0}', space=vmem, size = 0x10000, scoped, tag = 'input window, operand 2, single buffered']
    #allocation8 [shape = 'u8[65536]{0}', space=vmem, size = 0x10000, scoped, tag = 'input window, operand 3, single buffered']
    #allocation9 [shape = 's32[1]{0}', space=sflag, size = 0x4, scoped, tag = 'scoped memory for tpu_custom_call.1']
    #allocation10 [shape = 'u8[4096]{0}', space=vmem, size = 0x1000, scoped, tag = 'output window, operand 0, single buffered']
    %10 = vsyncpa [#allocation3], 0
    %11 = vsyncpa [#allocation6], 0
    %12 = vsyncpa [#allocation9], 0
    %13 = vsyncpa [#allocation4], 0
    // Predicated region
    $region2: #{tpu_custom_call.1} parent=1 // pred_check
      _
    $region3: #{tpu_custom_call.1} parent=1 // pred_check_branch
      %15 = sbr.rel (0) target = $region5
    $region4: #{tpu_custom_call.1} parent=1 // pred_region
      %s17 = ssub.s32 256, 256
      %18 = vsyncadd [#allocation3], %s17
      %s20 = sshll.u32 [#allocation2], 4
      %s21 = int_to_ptr.vmem [resolvable:$true] %s20
      %23 = dma.hbm_to_vmem [thread:$0]  %s0, 256, %s21, [#allocation3]
    $region5: #{tpu_custom_call.1} parent=1 // pred_fallthru
      _
    // Predicated region
    $region6: #{tpu_custom_call.1} parent=1 // pred_check
      _
    $region7: #{tpu_custom_call.1} parent=1 // pred_check_branch
      %25 = sbr.rel (0) target = $region9
    $region8: #{tpu_custom_call.1} parent=1 // pred_region
      %s27 = ssub.s32 2048, 2048
      %28 = vsyncadd [#allocation6], %s27
      %s29 = sshll.u32 [#allocation5], 4
      %s30 = int_to_ptr.vmem [resolvable:$true] %s29
      %35 = dma.hbm_to_vmem [thread:$0]  %s1, 2048, %s30, [#allocation6], 64, 64, 4
    $region9: #{tpu_custom_call.1} parent=1 // pred_fallthru
      _
    // Predicated region
    $region10: #{tpu_custom_call.1} parent=1 // pred_check
      _
    $region11: #{tpu_custom_call.1} parent=1 // pred_check_branch
      %37 = sbr.rel (0) target = $region13
    $region12: #{tpu_custom_call.1} parent=1 // pred_region
      %s39 = ssub.s32 2048, 2048
      %40 = vsyncadd [#allocation6], %s39
      %s41 = sshll.u32 [#allocation7], 4
      %s42 = int_to_ptr.vmem [resolvable:$true] %s41
      %47 = dma.hbm_to_vmem [thread:$0]  %s2, 2048, %s42, [#allocation6], 128, 128, 8
    $region13: #{tpu_custom_call.1} parent=1 // pred_fallthru
      _
    // Predicated region
    $region14: #{tpu_custom_call.1} parent=1 // pred_check
      _
    $region15: #{tpu_custom_call.1} parent=1 // pred_check_branch
      %49 = sbr.rel (0) target = $region17
    $region16: #{tpu_custom_call.1} parent=1 // pred_region
      %s51 = ssub.s32 2048, 2048
      %52 = vsyncadd [#allocation9], %s51
      %s53 = sshll.u32 [#allocation8], 4
      %s54 = int_to_ptr.vmem [resolvable:$true] %s53
      %59 = dma.hbm_to_vmem [thread:$0]  %s3, 2048, %s54, [#allocation9], 64, 64, 4
    $region17: #{tpu_custom_call.1} parent=1 // pred_fallthru
      _
    // Predicated region
    $region18: #{tpu_custom_call.1} parent=1 // pred_check
      _
    $region19: #{tpu_custom_call.1} parent=1 // pred_check_branch
      %61 = sbr.rel (0) target = $region21
    $region20: #{tpu_custom_call.1} parent=1 // pred_region
      _
    $region21: #{tpu_custom_call.1} parent=1 // pred_fallthru
      _
    // Predicated region
    $region22: #{tpu_custom_call.1} parent=1 // pred_check
      _
    $region23: #{tpu_custom_call.1} parent=1 // pred_check_branch
      %63 = sbr.rel (0) target = $region25
    $region24: #{tpu_custom_call.1} parent=1 // pred_region
      %64 = dma.done [#allocation3], 256
    $region25: #{tpu_custom_call.1} parent=1 // pred_fallthru
      _
    // Predicated region
    $region26: #{tpu_custom_call.1} parent=1 // pred_check
      _
    $region27: #{tpu_custom_call.1} parent=1 // pred_check_branch
      %66 = sbr.rel (0) target = $region29
    $region28: #{tpu_custom_call.1} parent=1 // pred_region
      %67 = dma.done [#allocation6], 2048
    $region29: #{tpu_custom_call.1} parent=1 // pred_fallthru
      _
    // Predicated region
    $region30: #{tpu_custom_call.1} parent=1 // pred_check
      _
    $region31: #{tpu_custom_call.1} parent=1 // pred_check_branch
      %69 = sbr.rel (0) target = $region33
    $region32: #{tpu_custom_call.1} parent=1 // pred_region
      %70 = dma.done [#allocation6], 2048
    $region33: #{tpu_custom_call.1} parent=1 // pred_fallthru
      _
    // Predicated region
    $region34: #{tpu_custom_call.1} parent=1 // pred_check
      _
    $region35: #{tpu_custom_call.1} parent=1 // pred_check_branch
      %72 = sbr.rel (0) target = $region37
    $region36: #{tpu_custom_call.1} parent=1 // pred_region
      %73 = dma.done [#allocation9], 2048
    $region37: #{tpu_custom_call.1} parent=1 // pred_fallthru
      _
    %v75 = vld [vmem:[#allocation2] sm:$0xff]
    %v76 = vld [vmem:[#allocation2 + $0x8] sm:$0xff]
    %v77 = vpack.c.bf16 %v75, %v75
    %v78 = vpack.c.bf16 %v76, %v76
    %v79 = vld [vmem:[#allocation5] sm:$0xf]
    %v80 = vld [vmem:[#allocation5 + $0x4] sm:$0xf]
    %v81 = vld [vmem:[#allocation5 + $0x8] sm:$0xf]
    %v82 = vld [vmem:[#allocation5 + $0xc] sm:$0xf]
    %v83 = vld [vmem:[#allocation5 + $0x10] sm:$0xf]
    %v84 = vld [vmem:[#allocation5 + $0x14] sm:$0xf]
    %v85 = vld [vmem:[#allocation5 + $0x18] sm:$0xf]
    %v86 = vld [vmem:[#allocation5 + $0x1c] sm:$0xf]
    %v87 = vld [vmem:[#allocation5 + $0x20] sm:$0xf]
    %v88 = vld [vmem:[#allocation5 + $0x24] sm:$0xf]
    %v89 = vld [vmem:[#allocation5 + $0x28] sm:$0xf]
    %v90 = vld [vmem:[#allocation5 + $0x2c] sm:$0xf]
    %v91 = vld [vmem:[#allocation5 + $0x30] sm:$0xf]
    %v92 = vld [vmem:[#allocation5 + $0x34] sm:$0xf]
    %v93 = vld [vmem:[#allocation5 + $0x38] sm:$0xf]
    %v94 = vld [vmem:[#allocation5 + $0x3c] sm:$0xf]
    %v95 = vld [vmem:[#allocation5 + $0x40] sm:$0xf]
    %v96 = vld [vmem:[#allocation5 + $0x44] sm:$0xf]
    %v97 = vld [vmem:[#allocation5 + $0x48] sm:$0xf]
    %v98 = vld [vmem:[#allocation5 + $0x4c] sm:$0xf]
    %v99 = vld [vmem:[#allocation5 + $0x50] sm:$0xf]
    %v100 = vld [vmem:[#allocation5 + $0x54] sm:$0xf]
    %v101 = vld [vmem:[#allocation5 + $0x58] sm:$0xf]
    %v102 = vld [vmem:[#allocation5 + $0x5c] sm:$0xf]
    %v103 = vld [vmem:[#allocation5 + $0x60] sm:$0xf]
    %v104 = vld [vmem:[#allocation5 + $0x64] sm:$0xf]
    %v105 = vld [vmem:[#allocation5 + $0x68] sm:$0xf]
    %v106 = vld [vmem:[#allocation5 + $0x6c] sm:$0xf]
    %v107 = vld [vmem:[#allocation5 + $0x70] sm:$0xf]
    %v108 = vld [vmem:[#allocation5 + $0x74] sm:$0xf]
    %v109 = vld [vmem:[#allocation5 + $0x78] sm:$0xf]
    %v110 = vld [vmem:[#allocation5 + $0x7c] sm:$0xf]
    %v143 = vunpack.c.l.b16 %v79
    %v144 = vunpack.c.l.b16 %v80
    %v145 = vunpack.c.l.b16 %v81
    %v146 = vunpack.c.l.b16 %v82
    %v147 = vunpack.c.l.b16 %v83
    %v148 = vunpack.c.l.b16 %v84
    %v149 = vunpack.c.l.b16 %v85
    %v150 = vunpack.c.l.b16 %v86
    %v151 = vunpack.c.l.b16 %v87
    %v152 = vunpack.c.l.b16 %v88
    %v153 = vunpack.c.l.b16 %v89
    %v154 = vunpack.c.l.b16 %v90
    %v155 = vunpack.c.l.b16 %v91
    %v156 = vunpack.c.l.b16 %v92
    %v157 = vunpack.c.l.b16 %v93
    %v158 = vunpack.c.l.b16 %v94
    %v159 = vunpack.c.l.b16 %v95
    %v160 = vunpack.c.l.b16 %v96
    %v161 = vunpack.c.l.b16 %v97
    %v162 = vunpack.c.l.b16 %v98
    %v163 = vunpack.c.l.b16 %v99
    %v164 = vunpack.c.l.b16 %v100
    %v165 = vunpack.c.l.b16 %v101
    %v166 = vunpack.c.l.b16 %v102
    %v167 = vunpack.c.l.b16 %v103
    %v168 = vunpack.c.l.b16 %v104
    %v169 = vunpack.c.l.b16 %v105
    %v170 = vunpack.c.l.b16 %v106
    %v171 = vunpack.c.l.b16 %v107
    %v172 = vunpack.c.l.b16 %v108
    %v173 = vunpack.c.l.b16 %v109
    %v174 = vunpack.c.l.b16 %v110
    %v175 = vpack.c.b16 %v144, %v143
    %v176 = vpack.c.b16 %v146, %v145
    %v177 = vpack.c.b16 %v148, %v147
    %v178 = vpack.c.b16 %v150, %v149
    %v179 = vpack.c.b16 %v152, %v151
    %v180 = vpack.c.b16 %v154, %v153
    %v181 = vpack.c.b16 %v156, %v155
    %v182 = vpack.c.b16 %v158, %v157
    %v183 = vpack.c.b16 %v160, %v159
    %v184 = vpack.c.b16 %v162, %v161
    %v185 = vpack.c.b16 %v164, %v163
    %v186 = vpack.c.b16 %v166, %v165
    %v187 = vpack.c.b16 %v168, %v167
    %v188 = vpack.c.b16 %v170, %v169
    %v189 = vpack.c.b16 %v172, %v171
    %v190 = vpack.c.b16 %v174, %v173
    %207 = vmatprep.subr.bf16.mxu0 0
    %208 = vmatpush1.bf16.msra.mxu0 %v182
    %209 = vmatprep.subr.bf16.mxu0 0
    %210 = vmatpush1.bf16.msra.mxu0 %v181
    %211 = vmatprep.subr.bf16.mxu0 0
    %212 = vmatpush1.bf16.msra.mxu0 %v180
    %213 = vmatprep.subr.bf16.mxu0 0
    %214 = vmatpush1.bf16.msra.mxu0 %v179
    %215 = vmatprep.subr.bf16.mxu0 0
    %216 = vmatpush1.bf16.msra.mxu0 %v178
    %217 = vmatprep.subr.bf16.mxu0 0
    %218 = vmatpush1.bf16.msra.mxu0 %v177
    %219 = vmatprep.subr.bf16.mxu0 0
    %220 = vmatpush1.bf16.msra.mxu0 %v176
    %221 = vmatprep.subr.bf16.mxu0 0
    %222 = vmatpush1.bf16.msra.mxu0 %v175
    %223 = vmatprep.subr.bf16.mxu0 0
    %224 = vmatpush2.bf16.msra.mxu0 %v190
    %225 = vmatprep.subr.bf16.mxu0 0
    %226 = vmatpush2.bf16.msra.mxu0 %v189
    %227 = vmatprep.subr.bf16.mxu0 0
    %228 = vmatpush2.bf16.msra.mxu0 %v188
    %229 = vmatprep.subr.bf16.mxu0 0
    %230 = vmatpush2.bf16.msra.mxu0 %v187
    %231 = vmatprep.subr.bf16.mxu0 0
    %232 = vmatpush2.bf16.msra.mxu0 %v186
    %233 = vmatprep.subr.bf16.mxu0 0
    %234 = vmatpush2.bf16.msra.mxu0 %v185
    %235 = vmatprep.subr.bf16.mxu0 0
    %236 = vmatpush2.bf16.msra.mxu0 %v184
    %237 = vmatprep.subr.bf16.mxu0 0
    %238 = vmatpush2.bf16.msra.mxu0 %v183
    %239 = vmatprep.mubr.bf16.mxu0 %v78
    %240 = vmatmul.mubr.bf16.gmra.mxu0 %v77
    %v241 = vpop.f32.mrf.mxu0
    %v242 = vadd.f32 0.0, %v241
    %v243 = vpop.f32.mrf.mxu0
    %v244 = vpop.f32.mrf.mxu0
    %v245 = vpop.f32.mrf.mxu0
    %246 = vdwg.mxu0
    %v247 = vmul.f32 %v75, %v75
    %v248 = vmul.f32 %v76, %v76
    %v249 = vpack.c.bf16 %v247, %v247
    %v250 = vpack.c.bf16 %v248, %v248
    %251 = vmatprep.subr.bf16.mxu0 0
    %252 = vmatpush1.bf16.msra.mxu0 %v182
    %253 = vmatprep.subr.bf16.mxu0 0
    %254 = vmatpush1.bf16.msra.mxu0 %v181
    %255 = vmatprep.subr.bf16.mxu0 0
    %256 = vmatpush1.bf16.msra.mxu0 %v180
    %257 = vmatprep.subr.bf16.mxu0 0
    %258 = vmatpush1.bf16.msra.mxu0 %v179
    %259 = vmatprep.subr.bf16.mxu0 0
    %260 = vmatpush1.bf16.msra.mxu0 %v178
    %261 = vmatprep.subr.bf16.mxu0 0
    %262 = vmatpush1.bf16.msra.mxu0 %v177
    %263 = vmatprep.subr.bf16.mxu0 0
    %264 = vmatpush1.bf16.msra.mxu0 %v176
    %265 = vmatprep.subr.bf16.mxu0 0
    %266 = vmatpush1.bf16.msra.mxu0 %v175
    %267 = vmatprep.subr.bf16.mxu0 0
    %268 = vmatpush2.bf16.msra.mxu0 %v190
    %269 = vmatprep.subr.bf16.mxu0 0
    %270 = vmatpush2.bf16.msra.mxu0 %v189
    %271 = vmatprep.subr.bf16.mxu0 0
    %272 = vmatpush2.bf16.msra.mxu0 %v188
    %273 = vmatprep.subr.bf16.mxu0 0
    %274 = vmatpush2.bf16.msra.mxu0 %v187
    %275 = vmatprep.subr.bf16.mxu0 0
    %276 = vmatpush2.bf16.msra.mxu0 %v186
    %277 = vmatprep.subr.bf16.mxu0 0
    %278 = vmatpush2.bf16.msra.mxu0 %v185
    %279 = vmatprep.subr.bf16.mxu0 0
    %280 = vmatpush2.bf16.msra.mxu0 %v184
    %281 = vmatprep.subr.bf16.mxu0 0
    %282 = vmatpush2.bf16.msra.mxu0 %v183
    %283 = vmatprep.mubr.bf16.mxu0 %v250
    %284 = vmatmul.mubr.bf16.gmra.mxu0 %v249
    %v285 = vpop.f32.mrf.mxu0
    %v286 = vadd.f32 0.0, %v285
    %v287 = vpop.f32.mrf.mxu0
    %v288 = vpop.f32.mrf.mxu0
    %v289 = vpop.f32.mrf.mxu0
    %290 = vdwg.mxu0
    %v291 = vmul.f32 %v242, 0.015625
    %v292 = vmul.f32 %v286, 0.015625
    %v293 = vmul.f32 %v291, %v291
    %v294 = vsub.f32 %v292, %v293
    %v295 = vmax.f32 %v294, 0.0
    %v296 = vadd.f32 %v295, 1e-05
    %v297 = vrsqrt.pop %v296
    %v298 = vld [vmem:[#allocation7] sm:$0xff]
    %v299 = vld [vmem:[#allocation7 + $0x8] sm:$0xff]
    %v300 = vld [vmem:[#allocation7 + $0x10] sm:$0xff]
    %v301 = vld [vmem:[#allocation7 + $0x18] sm:$0xff]
    %v302 = vld [vmem:[#allocation7 + $0x20] sm:$0xff]
    %v303 = vld [vmem:[#allocation7 + $0x28] sm:$0xff]
    %v304 = vld [vmem:[#allocation7 + $0x30] sm:$0xff]
    %v305 = vld [vmem:[#allocation7 + $0x38] sm:$0xff]
    %v306 = vld [vmem:[#allocation7 + $0x40] sm:$0xff]
    %v307 = vld [vmem:[#allocation7 + $0x48] sm:$0xff]
    %v308 = vld [vmem:[#allocation7 + $0x50] sm:$0xff]
    %v309 = vld [vmem:[#allocation7 + $0x58] sm:$0xff]
    %v310 = vld [vmem:[#allocation7 + $0x60] sm:$0xff]
    %v311 = vld [vmem:[#allocation7 + $0x68] sm:$0xff]
    %v312 = vld [vmem:[#allocation7 + $0x70] sm:$0xff]
    %v313 = vld [vmem:[#allocation7 + $0x78] sm:$0xff]
    %v314 = vpack.c.bf16 %v291, %v291
    %v331 = vunpack.c.l.b16 %v298
    %v332 = vunpack.c.h.b16 %v298
    %v333 = vunpack.c.l.b16 %v299
    %v334 = vunpack.c.h.b16 %v299
    %v335 = vunpack.c.l.b16 %v300
    %v336 = vunpack.c.h.b16 %v300
    %v337 = vunpack.c.l.b16 %v301
    %v338 = vunpack.c.h.b16 %v301
    %v339 = vunpack.c.l.b16 %v302
    %v340 = vunpack.c.h.b16 %v302
    %v341 = vunpack.c.l.b16 %v303
    %v342 = vunpack.c.h.b16 %v303
    %v343 = vunpack.c.l.b16 %v304
    %v344 = vunpack.c.h.b16 %v304
    %v345 = vunpack.c.l.b16 %v305
    %v346 = vunpack.c.h.b16 %v305
    %v347 = vunpack.c.l.b16 %v306
    %v348 = vunpack.c.h.b16 %v306
    %v349 = vunpack.c.l.b16 %v307
    %v350 = vunpack.c.h.b16 %v307
    %v351 = vunpack.c.l.b16 %v308
    %v352 = vunpack.c.h.b16 %v308
    %v353 = vunpack.c.l.b16 %v309
    %v354 = vunpack.c.h.b16 %v309
    %v355 = vunpack.c.l.b16 %v310
    %v356 = vunpack.c.h.b16 %v310
    %v357 = vunpack.c.l.b16 %v311
    %v358 = vunpack.c.h.b16 %v311
    %v359 = vunpack.c.l.b16 %v312
    %v360 = vunpack.c.h.b16 %v312
    %v361 = vunpack.c.l.b16 %v313
    %v362 = vunpack.c.h.b16 %v313
    %v363 = vpack.c.b16 %v333, %v331
    %v364 = vpack.c.b16 %v334, %v332
    %v365 = vpack.c.b16 %v337, %v335
    %v366 = vpack.c.b16 %v338, %v336
    %v367 = vpack.c.b16 %v341, %v339
    %v368 = vpack.c.b16 %v342, %v340
    %v369 = vpack.c.b16 %v345, %v343
    %v370 = vpack.c.b16 %v346, %v344
    %v371 = vpack.c.b16 %v349, %v347
    %v372 = vpack.c.b16 %v350, %v348
    %v373 = vpack.c.b16 %v353, %v351
    %v374 = vpack.c.b16 %v354, %v352
    %v375 = vpack.c.b16 %v357, %v355
    %v376 = vpack.c.b16 %v358, %v356
    %v377 = vpack.c.b16 %v361, %v359
    %v378 = vpack.c.b16 %v362, %v360
    %395 = vmatprep.subr.bf16.mxu0 %v378
    %396 = vmatpush1.bf16.msra.mxu0 %v377
    %397 = vmatprep.subr.bf16.mxu0 %v376
    %398 = vmatpush1.bf16.msra.mxu0 %v375
    %399 = vmatprep.subr.bf16.mxu0 %v374
    %400 = vmatpush1.bf16.msra.mxu0 %v373
    %401 = vmatprep.subr.bf16.mxu0 %v372
    %402 = vmatpush1.bf16.msra.mxu0 %v371
    %403 = vmatprep.subr.bf16.mxu0 %v370
    %404 = vmatpush1.bf16.msra.mxu0 %v369
    %405 = vmatprep.subr.bf16.mxu0 %v368
    %406 = vmatpush1.bf16.msra.mxu0 %v367
    %407 = vmatprep.subr.bf16.mxu0 %v366
    %408 = vmatpush1.bf16.msra.mxu0 %v365
    %409 = vmatprep.subr.bf16.mxu0 %v364
    %410 = vmatpush1.bf16.msra.mxu0 %v363
    %411 = vmatprep.subr.bf16.mxu0 0
    %412 = vmatpush2.bf16.msra.mxu0 0
    %413 = vmatprep.subr.bf16.mxu0 0
    %414 = vmatpush2.bf16.msra.mxu0 0
    %415 = vmatprep.subr.bf16.mxu0 0
    %416 = vmatpush2.bf16.msra.mxu0 0
    %417 = vmatprep.subr.bf16.mxu0 0
    %418 = vmatpush2.bf16.msra.mxu0 0
    %419 = vmatprep.subr.bf16.mxu0 0
    %420 = vmatpush2.bf16.msra.mxu0 0
    %421 = vmatprep.subr.bf16.mxu0 0
    %422 = vmatpush2.bf16.msra.mxu0 0
    %423 = vmatprep.subr.bf16.mxu0 0
    %424 = vmatpush2.bf16.msra.mxu0 0
    %425 = vmatprep.subr.bf16.mxu0 0
    %426 = vmatpush2.bf16.msra.mxu0 0
    %427 = vmatprep.mubr.bf16.mxu0 0
    %428 = vmatmul.mubr.bf16.gmra.mxu0 %v314
    %v429 = vpop.f32.mrf.mxu0
    %v430 = vadd.f32 0.0, %v429
    %v431 = vpop.f32.mrf.mxu0
    %v432 = vadd.f32 0.0, %v431
    %v433 = vpop.f32.mrf.mxu0
    %v434 = vpop.f32.mrf.mxu0
    %435 = vdwg.mxu0
    %v436 = vpack.c.bf16 %v297, %v297
    %437 = vmatprep.subr.bf16.mxu0 %v378
    %438 = vmatpush1.bf16.msra.mxu0 %v377
    %439 = vmatprep.subr.bf16.mxu0 %v376
    %440 = vmatpush1.bf16.msra.mxu0 %v375
    %441 = vmatprep.subr.bf16.mxu0 %v374
    %442 = vmatpush1.bf16.msra.mxu0 %v373
    %443 = vmatprep.subr.bf16.mxu0 %v372
    %444 = vmatpush1.bf16.msra.mxu0 %v371
    %445 = vmatprep.subr.bf16.mxu0 %v370
    %446 = vmatpush1.bf16.msra.mxu0 %v369
    %447 = vmatprep.subr.bf16.mxu0 %v368
    %448 = vmatpush1.bf16.msra.mxu0 %v367
    %449 = vmatprep.subr.bf16.mxu0 %v366
    %450 = vmatpush1.bf16.msra.mxu0 %v365
    %451 = vmatprep.subr.bf16.mxu0 %v364
    %452 = vmatpush1.bf16.msra.mxu0 %v363
    %453 = vmatprep.subr.bf16.mxu0 0
    %454 = vmatpush2.bf16.msra.mxu0 0
    %455 = vmatprep.subr.bf16.mxu0 0
    %456 = vmatpush2.bf16.msra.mxu0 0
    %457 = vmatprep.subr.bf16.mxu0 0
    %458 = vmatpush2.bf16.msra.mxu0 0
    %459 = vmatprep.subr.bf16.mxu0 0
    %460 = vmatpush2.bf16.msra.mxu0 0
    %461 = vmatprep.subr.bf16.mxu0 0
    %462 = vmatpush2.bf16.msra.mxu0 0
    %463 = vmatprep.subr.bf16.mxu0 0
    %464 = vmatpush2.bf16.msra.mxu0 0
    %465 = vmatprep.subr.bf16.mxu0 0
    %466 = vmatpush2.bf16.msra.mxu0 0
    %467 = vmatprep.subr.bf16.mxu0 0
    %468 = vmatpush2.bf16.msra.mxu0 0
    %469 = vmatprep.mubr.bf16.mxu0 0
    %470 = vmatmul.mubr.bf16.gmra.mxu0 %v436
    %v471 = vpop.f32.mrf.mxu0
    %v472 = vadd.f32 0.0, %v471
    %v473 = vpop.f32.mrf.mxu0
    %v474 = vadd.f32 0.0, %v473
    %v475 = vpop.f32.mrf.mxu0
    %v476 = vpop.f32.mrf.mxu0
    %477 = vdwg.mxu0
    %v478 = vsub.f32 %v75, %v430
    %v479 = vsub.f32 %v76, %v432
    %v480 = vmul.f32 %v478, %v472
    %v481 = vmul.f32 %v479, %v474
    %v482 = vpack.c.bf16 %v480, %v480
    %v483 = vpack.c.bf16 %v481, %v481
    %v484 = vld [vmem:[#allocation8] sm:$0xf]
    %v485 = vld [vmem:[#allocation8 + $0x4] sm:$0xf]
    %v486 = vld [vmem:[#allocation8 + $0x8] sm:$0xf]
    %v487 = vld [vmem:[#allocation8 + $0xc] sm:$0xf]
    %v488 = vld [vmem:[#allocation8 + $0x10] sm:$0xf]
    %v489 = vld [vmem:[#allocation8 + $0x14] sm:$0xf]
    %v490 = vld [vmem:[#allocation8 + $0x18] sm:$0xf]
    %v491 = vld [vmem:[#allocation8 + $0x1c] sm:$0xf]
    %v492 = vld [vmem:[#allocation8 + $0x20] sm:$0xf]
    %v493 = vld [vmem:[#allocation8 + $0x24] sm:$0xf]
    %v494 = vld [vmem:[#allocation8 + $0x28] sm:$0xf]
    %v495 = vld [vmem:[#allocation8 + $0x2c] sm:$0xf]
    %v496 = vld [vmem:[#allocation8 + $0x30] sm:$0xf]
    %v497 = vld [vmem:[#allocation8 + $0x34] sm:$0xf]
    %v498 = vld [vmem:[#allocation8 + $0x38] sm:$0xf]
    %v499 = vld [vmem:[#allocation8 + $0x3c] sm:$0xf]
    %v500 = vld [vmem:[#allocation8 + $0x40] sm:$0xf]
    %v501 = vld [vmem:[#allocation8 + $0x44] sm:$0xf]
    %v502 = vld [vmem:[#allocation8 + $0x48] sm:$0xf]
    %v503 = vld [vmem:[#allocation8 + $0x4c] sm:$0xf]
    %v504 = vld [vmem:[#allocation8 + $0x50] sm:$0xf]
    %v505 = vld [vmem:[#allocation8 + $0x54] sm:$0xf]
    %v506 = vld [vmem:[#allocation8 + $0x58] sm:$0xf]
    %v507 = vld [vmem:[#allocation8 + $0x5c] sm:$0xf]
    %v508 = vld [vmem:[#allocation8 + $0x60] sm:$0xf]
    %v509 = vld [vmem:[#allocation8 + $0x64] sm:$0xf]
    %v510 = vld [vmem:[#allocation8 + $0x68] sm:$0xf]
    %v511 = vld [vmem:[#allocation8 + $0x6c] sm:$0xf]
    %v512 = vld [vmem:[#allocation8 + $0x70] sm:$0xf]
    %v513 = vld [vmem:[#allocation8 + $0x74] sm:$0xf]
    %v514 = vld [vmem:[#allocation8 + $0x78] sm:$0xf]
    %v515 = vld [vmem:[#allocation8 + $0x7c] sm:$0xf]
    %v516 = vld [vmem:[%s4] sm:$0x1]
    %v518 = vlaneseq
    %v519 = vshrl.u32 %v518, 7
    %v520 = vsub.s32 0, %v519
    %v521 = vrot.slane %v516, %v520
    %v555 = vunpack.c.l.b16 %v484
    %v556 = vunpack.c.l.b16 %v485
    %v557 = vunpack.c.l.b16 %v486
    %v558 = vunpack.c.l.b16 %v487
    %v559 = vunpack.c.l.b16 %v488
    %v560 = vunpack.c.l.b16 %v489
    %v561 = vunpack.c.l.b16 %v490
    %v562 = vunpack.c.l.b16 %v491
    %v563 = vunpack.c.l.b16 %v492
    %v564 = vunpack.c.l.b16 %v493
    %v565 = vunpack.c.l.b16 %v494
    %v566 = vunpack.c.l.b16 %v495
    %v567 = vunpack.c.l.b16 %v496
    %v568 = vunpack.c.l.b16 %v497
    %v569 = vunpack.c.l.b16 %v498
    %v570 = vunpack.c.l.b16 %v499
    %v571 = vunpack.c.l.b16 %v500
    %v572 = vunpack.c.l.b16 %v501
    %v573 = vunpack.c.l.b16 %v502
    %v574 = vunpack.c.l.b16 %v503
    %v575 = vunpack.c.l.b16 %v504
    %v576 = vunpack.c.l.b16 %v505
    %v577 = vunpack.c.l.b16 %v506
    %v578 = vunpack.c.l.b16 %v507
    %v579 = vunpack.c.l.b16 %v508
    %v580 = vunpack.c.l.b16 %v509
    %v581 = vunpack.c.l.b16 %v510
    %v582 = vunpack.c.l.b16 %v511
    %v583 = vunpack.c.l.b16 %v512
    %v584 = vunpack.c.l.b16 %v513
    %v585 = vunpack.c.l.b16 %v514
    %v586 = vunpack.c.l.b16 %v515
    %v587 = vpack.c.b16 %v556, %v555
    %v588 = vpack.c.b16 %v558, %v557
    %v589 = vpack.c.b16 %v560, %v559
    %v590 = vpack.c.b16 %v562, %v561
    %v591 = vpack.c.b16 %v564, %v563
    %v592 = vpack.c.b16 %v566, %v565
    %v593 = vpack.c.b16 %v568, %v567
    %v594 = vpack.c.b16 %v570, %v569
    %v595 = vpack.c.b16 %v572, %v571
    %v596 = vpack.c.b16 %v574, %v573
    %v597 = vpack.c.b16 %v576, %v575
    %v598 = vpack.c.b16 %v578, %v577
    %v599 = vpack.c.b16 %v580, %v579
    %v600 = vpack.c.b16 %v582, %v581
    %v601 = vpack.c.b16 %v584, %v583
    %v602 = vpack.c.b16 %v586, %v585
    %619 = vmatprep.subr.bf16.mxu0 0
    %620 = vmatpush1.bf16.msra.mxu0 %v594
    %621 = vmatprep.subr.bf16.mxu0 0
    %622 = vmatpush1.bf16.msra.mxu0 %v593
    %623 = vmatprep.subr.bf16.mxu0 0
    %624 = vmatpush1.bf16.msra.mxu0 %v592
    %625 = vmatprep.subr.bf16.mxu0 0
    %626 = vmatpush1.bf16.msra.mxu0 %v591
    %627 = vmatprep.subr.bf16.mxu0 0
    %628 = vmatpush1.bf16.msra.mxu0 %v590
    %629 = vmatprep.subr.bf16.mxu0 0
    %630 = vmatpush1.bf16.msra.mxu0 %v589
    %631 = vmatprep.subr.bf16.mxu0 0
    %632 = vmatpush1.bf16.msra.mxu0 %v588
    %633 = vmatprep.subr.bf16.mxu0 0
    %634 = vmatpush1.bf16.msra.mxu0 %v587
    %635 = vmatprep.subr.bf16.mxu0 0
    %636 = vmatpush2.bf16.msra.mxu0 %v602
    %637 = vmatprep.subr.bf16.mxu0 0
    %638 = vmatpush2.bf16.msra.mxu0 %v601
    %639 = vmatprep.subr.bf16.mxu0 0
    %640 = vmatpush2.bf16.msra.mxu0 %v600
    %641 = vmatprep.subr.bf16.mxu0 0
    %642 = vmatpush2.bf16.msra.mxu0 %v599
    %643 = vmatprep.subr.bf16.mxu0 0
    %644 = vmatpush2.bf16.msra.mxu0 %v598
    %645 = vmatprep.subr.bf16.mxu0 0
    %646 = vmatpush2.bf16.msra.mxu0 %v597
    %647 = vmatprep.subr.bf16.mxu0 0
    %648 = vmatpush2.bf16.msra.mxu0 %v596
    %649 = vmatprep.subr.bf16.mxu0 0
    %650 = vmatpush2.bf16.msra.mxu0 %v595
    %651 = vmatprep.mubr.bf16.mxu0 %v483
    %652 = vmatmul.mubr.bf16.gmra.mxu0 %v482
    %v653 = vpop.f32.mrf.mxu0
    %v654 = vadd.f32 %v521, %v653
    %v655 = vpop.f32.mrf.mxu0
    %v656 = vpop.f32.mrf.mxu0
    %v657 = vpop.f32.mrf.mxu0
    %658 = vdwg.mxu0
    %659 = vst [vmem:[#allocation10] sm:$0xff] %v654
    // Predicated region
    $region38: #{tpu_custom_call.1} parent=1 // pred_check
      _
    $region39: #{tpu_custom_call.1} parent=1 // pred_check_branch
      %661 = sbr.rel (0) target = $region41
    $region40: #{tpu_custom_call.1} parent=1 // pred_region
      %s663 = ssub.s32 128, 128
      %664 = vsyncadd [#allocation4], %s663
      %s666 = sshll.u32 [#allocation10], 4
      %s667 = int_to_ptr.vmem [resolvable:$true] %s666
      %669 = dma.vmem_to_hbm [thread:$0]  %s667, 128, %s5, [#allocation4]
    $region41: #{tpu_custom_call.1} parent=1 // pred_fallthru
      _
    // Predicated region
    $region42: #{tpu_custom_call.1} parent=1 // pred_check
      _
    $region43: #{tpu_custom_call.1} parent=1 // pred_check_branch
      %671 = sbr.rel (0) target = $region45
    $region44: #{tpu_custom_call.1} parent=1 // pred_region
      %672 = dma.done [#allocation4], 128
    $region45: #{tpu_custom_call.1} parent=1 // pred_fallthru
      _
    %673 = vsyncpa [#allocation3], 1
    %674 = vsyncpa [#allocation6], 1
    %675 = vsyncpa [#allocation9], 1
    %676 = vsyncpa [#allocation4], 1

</llo_original>
